<compile_context>
chip_gen: v5e
topology: v5e:2x2
jax: 0.10.0
libtpu: 0.0.40
codegen_flags: <defaults>
</compile_context>

<pallas_src>
import functools
import jax
import jax.numpy as jnp
from jax.experimental import pallas as pl
from jax.experimental.pallas import tpu as pltpu

EPS = 1e-6            # LayerNorm eps (Annotated Transformer default)
NEG_INF = -1e9        # masked_fill(mask == 0, -1e9)
MAX_ROW_TILE = 512    # row tile for row-wise (LN / projection / FFN) kernels
MAX_Q_TILE = 256      # query tile for the attention kernel
MAX_FF_TILE = 512     # d_ff reduction tile for the FFN kernel

# Set to jnp.bfloat16 to run the MXU at native throughput (~2-4x) when the
# accuracy budget allows; float32 keeps bit-closeness to the PyTorch reference.
MXU_OPERAND_DTYPE = jnp.float32

_DEFAULT_SCOPED_VMEM = 30 * 1024 * 1024


# ----------------------------- helpers -------------------------------------

def _row_tiles(rows, max_tile, align=8):
    """(tile, grid) for a row-parallel axis.

    Prefers a large exact-divisor tile; otherwise falls back to a ragged last
    tile (rows are independent in all row-wise kernels, so OOB reads only feed
    garbage rows that are dropped on the masked write-back)."""
    if rows <= max_tile:
        return rows, 1
    t = max_tile - max_tile % align
    while t >= 128:
        if rows % t == 0:
            return t, rows // t
        t -= align
    t = max_tile - max_tile % align
    return t, pl.cdiv(rows, t)


def _reduction_tile(n, max_tile, align=128):
    """Exact-divisor tile for a reduction axis (ragged blocks not allowed)."""
    if n <= max_tile:
        return n
    t = max_tile - max_tile % align
    while t >= align:
        if n % t == 0:
            return t
        t -= align
    return n


def _compiler_params(dim_sem, est_vmem_bytes):
    """Only raise the scoped-VMEM limit when the estimated footprint needs it."""
    kwargs = dict(dimension_semantics=dim_sem)
    if est_vmem_bytes > _DEFAULT_SCOPED_VMEM:
        kwargs["vmem_limit_bytes"] = min(int(est_vmem_bytes * 1.25),
                                         100 * 1024 * 1024)
    return pltpu.CompilerParams(**kwargs)


def _layernorm_f32(x, a, b):
    """Pre-norm LayerNorm with unbiased std (torch .std default) and eps on std."""
    d = x.shape[-1]
    mean = jnp.mean(x, axis=-1, keepdims=True)
    xc = x - mean
    var = jnp.sum(xc * xc, axis=-1, keepdims=True) * (1.0 / (d - 1))
    inv = pl.reciprocal(jnp.sqrt(var) + EPS, approx=True)   # EUP slot, not VALU
    return a * xc * inv + b


# ----------------------------- Pallas kernels ------------------------------

def _layernorm_kernel(x_ref, a_ref, b_ref, o_ref):
    x = x_ref[...].astype(jnp.float32)
    o_ref[...] = _layernorm_f32(x, a_ref[...], b_ref[...]).astype(o_ref.dtype)


def _ln_matmul_kernel(x_ref, a_ref, b_ref, w_ref, wb_ref, o_ref):
    # LayerNorm(x) @ W + bias   (fused pre-norm + projection)
    x = x_ref[...].astype(jnp.float32)
    y = _layernorm_f32(x, a_ref[...], b_ref[...]).astype(MXU_OPERAND_DTYPE)
    o_ref[...] = (jnp.dot(y, w_ref[...].astype(MXU_OPERAND_DTYPE),
                          preferred_element_type=jnp.float32)
                  + wb_ref[...]).astype(o_ref.dtype)


def _matmul_kernel(x_ref, w_ref, wb_ref, o_ref):
    # x @ W + bias (fused K/V projection of the encoder memory)
    o_ref[...] = (jnp.dot(x_ref[...].astype(MXU_OPERAND_DTYPE),
                          w_ref[...].astype(MXU_OPERAND_DTYPE),
                          preferred_element_type=jnp.float32)
                  + wb_ref[...]).astype(o_ref.dtype)


def _ln_ffn_kernel(x_ref, a_ref, b_ref, w1_ref, b1_ref, w2_ref, b2_ref, o_ref,
                   y_ref, acc_ref):
    # x + ( ReLU(LayerNorm(x) @ W1 + b1) @ W2 + b2 ), d_ff-tiled:
    #   grid axis 1 walks d_ff chunks; LN(x) is computed once into a scratch and
    #   the second matmul accumulates per chunk (weights never fully resident).
    j = pl.program_id(1)

    @pl.when(j == 0)
    def _():
        x = x_ref[...].astype(jnp.float32)
        y_ref[...] = _layernorm_f32(x, a_ref[...], b_ref[...])
        acc_ref[...] = x + b2_ref[...]          # residual + final bias, added once

    h = jnp.dot(y_ref[...].astype(MXU_OPERAND_DTYPE),
                w1_ref[...].astype(MXU_OPERAND_DTYPE),
                preferred_element_type=jnp.float32) + b1_ref[...]
    h = jnp.maximum(h, 0.0)
    acc_ref[...] += jnp.dot(h.astype(MXU_OPERAND_DTYPE),
                            w2_ref[...].astype(MXU_OPERAND_DTYPE),
                            preferred_element_type=jnp.float32)

    @pl.when(j == pl.num_programs(1) - 1)
    def _():
        o_ref[...] = acc_ref[...].astype(o_ref.dtype)


def _attn_kernel(q_ref, k_ref, v_ref, m_ref, wo_ref, bo_ref, r_ref, o_ref,
                 acc_ref, *, scale):
    # One (batch, query-tile, head) step per grid point.  Heads are the
    # reduction axis of the fused output projection: each head's context is
    # projected with its (dk, D) slice of W_o and accumulated in VMEM, so the
    # lane-dense (tq, D) output (projection + residual included) is stored once.
    h = pl.program_id(2)

    q = q_ref[0, 0].astype(jnp.float32)          # (tq, dk)
    k = k_ref[0, 0].astype(jnp.float32)          # (Sk, dk)
    v = v_ref[0, 0].astype(jnp.float32)          # (Sk, dk)

    # scores = q @ k^T (contract head dim; no materialized transpose)
    s = jax.lax.dot_general(q, k, (((1,), (1,)), ((), ())),
                            preferred_element_type=jnp.float32) * scale
    s = jnp.where(m_ref[0] != 0, s, NEG_INF)     # masked_fill(mask == 0, -1e9)

    s_max = jnp.max(s, axis=-1, keepdims=True)
    p = jnp.exp(s - s_max)
    l = jnp.sum(p, axis=-1, keepdims=True)
    ctx = jnp.dot(p, v, preferred_element_type=jnp.float32)     # (tq, dk)
    ctx = ctx * pl.reciprocal(l, approx=True)    # normalize AFTER PV matmul

    proj = jnp.dot(ctx, wo_ref[0].astype(jnp.float32),
                   preferred_element_type=jnp.float32)          # (tq, D)

    @pl.when(h == 0)
    def _():
        acc_ref[...] = r_ref[0].astype(jnp.float32) + bo_ref[...]

    acc_ref[...] += proj

    @pl.when(h == pl.num_programs(2) - 1)
    def _():
        o_ref[0] = acc_ref[...].astype(o_ref.dtype)


# ----------------------------- pallas_call wrappers -------------------------

def layernorm(x2d, a, b):
    rows, d = x2d.shape
    tm, g = _row_tiles(rows, MAX_ROW_TILE)
    est = 4 * (2 * 2 * tm * d + 4 * d)
    return pl.pallas_call(
        _layernorm_kernel,
        grid=(g,),
        in_specs=[
            pl.BlockSpec((tm, d), lambda i: (i, 0)),
            pl.BlockSpec((1, d), lambda i: (0, 0)),
            pl.BlockSpec((1, d), lambda i: (0, 0)),
        ],
        out_specs=pl.BlockSpec((tm, d), lambda i: (i, 0)),
        out_shape=jax.ShapeDtypeStruct((rows, d), x2d.dtype),
        compiler_params=_compiler_params(("parallel",), est),
    )(x2d, a.reshape(1, -1), b.reshape(1, -1))


def ln_matmul(x2d, a, b, w, wb):
    rows, d_in = x2d.shape
    d_out = w.shape[1]
    tm, g = _row_tiles(rows, MAX_ROW_TILE)
    est = 4 * 2 * (tm * d_in + d_in * d_out + tm * d_out + 3 * d_in + d_out)
    return pl.pallas_call(
        _ln_matmul_kernel,
        grid=(g,),
        in_specs=[
            pl.BlockSpec((tm, d_in), lambda i: (i, 0)),
            pl.BlockSpec((1, d_in), lambda i: (0, 0)),
            pl.BlockSpec((1, d_in), lambda i: (0, 0)),
            pl.BlockSpec((d_in, d_out), lambda i: (0, 0)),
            pl.BlockSpec((1, d_out), lambda i: (0, 0)),
        ],
        out_specs=pl.BlockSpec((tm, d_out), lambda i: (i, 0)),
        out_shape=jax.ShapeDtypeStruct((rows, d_out), x2d.dtype),
        compiler_params=_compiler_params(("parallel",), est),
    )(x2d, a.reshape(1, -1), b.reshape(1, -1), w, wb.reshape(1, -1))


def matmul(x2d, w, wb):
    rows, d_in = x2d.shape
    d_out = w.shape[1]
    tm, g = _row_tiles(rows, MAX_ROW_TILE)
    est = 4 * 2 * (tm * d_in + d_in * d_out + tm * d_out + d_out)
    return pl.pallas_call(
        _matmul_kernel,
        grid=(g,),
        in_specs=[
            pl.BlockSpec((tm, d_in), lambda i: (i, 0)),
            pl.BlockSpec((d_in, d_out), lambda i: (0, 0)),
            pl.BlockSpec((1, d_out), lambda i: (0, 0)),
        ],
        out_specs=pl.BlockSpec((tm, d_out), lambda i: (i, 0)),
        out_shape=jax.ShapeDtypeStruct((rows, d_out), x2d.dtype),
        compiler_params=_compiler_params(("parallel",), est),
    )(x2d, w, wb.reshape(1, -1))


def ln_ffn(x2d, a, b, w1, b1, w2, b2):
    rows, d = x2d.shape
    d_ff = w1.shape[1]
    tm, rg = _row_tiles(rows, MAX_ROW_TILE)
    tf = _reduction_tile(d_ff, MAX_FF_TILE)
    fg = d_ff // tf
    est = 4 * (2 * (tm * d + d * tf + tf + tf * d + 3 * d + tm * d)
               + 2 * tm * d)   # + scratches
    return pl.pallas_call(
        _ln_ffn_kernel,
        grid=(rg, fg),
        in_specs=[
            pl.BlockSpec((tm, d), lambda i, j: (i, 0)),
            pl.BlockSpec((1, d), lambda i, j: (0, 0)),
            pl.BlockSpec((1, d), lambda i, j: (0, 0)),
            pl.BlockSpec((d, tf), lambda i, j: (0, j)),
            pl.BlockSpec((1, tf), lambda i, j: (0, j)),
            pl.BlockSpec((tf, d), lambda i, j: (j, 0)),
            pl.BlockSpec((1, d), lambda i, j: (0, 0)),
        ],
        out_specs=pl.BlockSpec((tm, d), lambda i, j: (i, 0)),
        out_shape=jax.ShapeDtypeStruct((rows, d), x2d.dtype),
        scratch_shapes=[pltpu.VMEM((tm, d), jnp.float32),
                        pltpu.VMEM((tm, d), jnp.float32)],
        compiler_params=_compiler_params(("parallel", "arbitrary"), est),
    )(x2d, a.reshape(1, -1), b.reshape(1, -1), w1, b1.reshape(1, -1),
      w2, b2.reshape(1, -1))


def attention_block(q, k, v, mask_i8, wo, bo, residual, H):
    """residual + [softmax(mask(QK^T / sqrt(dk))) V] @ W_o + b_o, one kernel.

    grid = (batch, query tiles, heads); heads is the innermost (reduction) axis
    of the fused output projection and is accumulated in a VMEM scratch."""
    B, Sq, D = q.shape
    Sk = k.shape[1]
    dk = D // H

    # Head split done once in XLA so the kernel sees lane-aligned (.., S, dk)
    # per-head blocks (no in-kernel lane slicing / concatenation).
    qh = q.reshape(B, Sq, H, dk).transpose(0, 2, 1, 3)   # (B, H, Sq, dk)
    kh = k.reshape(B, Sk, H, dk).transpose(0, 2, 1, 3)   # (B, H, Sk, dk)
    vh = v.reshape(B, Sk, H, dk).transpose(0, 2, 1, 3)   # (B, H, Sk, dk)
    wo3 = wo.reshape(H, dk, D)

    tq, qg = _row_tiles(Sq, MAX_Q_TILE, align=32)
    est = (4 * 2 * (tq * dk + 2 * Sk * dk + dk * D + 2 * tq * D + D)
           + 2 * tq * Sk + 4 * tq * D)

    kernel = functools.partial(_attn_kernel, scale=1.0 / float(dk) ** 0.5)
    return pl.pallas_call(
        kernel,
        grid=(B, qg, H),
        in_specs=[
            pl.BlockSpec((1, 1, tq, dk), lambda b, i, h: (b, h, i, 0)),   # q
            pl.BlockSpec((1, 1, Sk, dk), lambda b, i, h: (b, h, 0, 0)),   # k
            pl.BlockSpec((1, 1, Sk, dk), lambda b, i, h: (b, h, 0, 0)),   # v
            pl.BlockSpec((1, tq, Sk), lambda b, i, h: (b, i, 0)),         # mask (int8)
            pl.BlockSpec((1, dk, D), lambda b, i, h: (h, 0, 0)),          # W_o head slice
            pl.BlockSpec((1, D), lambda b, i, h: (0, 0)),                 # b_o
            pl.BlockSpec((1, tq, D), lambda b, i, h: (b, i, 0)),          # residual
        ],
        out_specs=pl.BlockSpec((1, tq, D), lambda b, i, h: (b, i, 0)),
        out_shape=jax.ShapeDtypeStruct((B, Sq, D), residual.dtype),
        scratch_shapes=[pltpu.VMEM((tq, D), jnp.float32)],
        compiler_params=_compiler_params(("parallel", "parallel", "arbitrary"),
                                         est),
    )(qh, kh, vh, mask_i8, wo3, bo.reshape(1, -1), residual)


# --------------------------- model glue (jitted JAX) ------------------------

def decoder_layer(x, memory, src_mask_i8, tgt_mask_i8, p, H):
    # TODO(synk): dropout is identity (eval-mode semantics)
    B, S, D = x.shape
    Sm = memory.shape[1]

    # --- sublayer 0: pre-norm self attention (LN fused into QKV projection;
    #     output projection + residual fused into the attention kernel) ---
    sa = p["self_attn"]
    qkv = ln_matmul(x.reshape(B * S, D), p["ln0_a"], p["ln0_b"],
                    sa["wqkv"], sa["bqkv"])                      # (B*S, 3D)
    q = qkv[:, :D].reshape(B, S, D)
    k = qkv[:, D:2 * D].reshape(B, S, D)
    v = qkv[:, 2 * D:].reshape(B, S, D)
    x = attention_block(q, k, v, tgt_mask_i8, sa["wo"], sa["bo"], x, H)

    # --- sublayer 1: pre-norm cross attention (LN fused into Q projection,
    #     fused KV projection of the encoder memory) ---
    ca = p["src_attn"]
    q = ln_matmul(x.reshape(B * S, D), p["ln1_a"], p["ln1_b"],
                  ca["wq"], ca["bq"]).reshape(B, S, D)
    kv = matmul(memory.reshape(B * Sm, D), ca["wkv"], ca["bkv"])  # (B*Sm, 2D)
    k = kv[:, :D].reshape(B, Sm, D)
    v = kv[:, D:].reshape(B, Sm, D)
    x = attention_block(q, k, v, src_mask_i8, ca["wo"], ca["bo"], x, H)

    # --- sublayer 2: pre-norm feed forward + residual (single fused kernel,
    #     d_ff-tiled so FFN weights are never fully VMEM-resident) ---
    f = p["ffn"]
    y = ln_ffn(x.reshape(B * S, D), p["ln2_a"], p["ln2_b"],
               f["w1"], f["b1"], f["w2"], f["b2"])
    return y.reshape(B, S, D)


@functools.partial(jax.jit, static_argnames="H")
def _decoder_forward_jit(x, memory, src_mask, tgt_mask, params, *, H):
    # Masks passed to the attention kernels as int8 and expanded in-kernel
    # (no dense f32 bias materialized in HBM; quarter the mask DMA bytes).
    tgt_mask_i8 = (tgt_mask != 0).astype(jnp.int8)
    src_mask_i8 = (src_mask != 0).astype(jnp.int8)
    for lp in params["layers"]:
        x = decoder_layer(x, memory, src_mask_i8, tgt_mask_i8, lp, H)
    B, S, D = x.shape
    y = layernorm(x.reshape(B * S, D), params["norm_a"], params["norm_b"])
    return y.reshape(B, S, D)


def decoder_forward(x, memory, src_mask, tgt_mask, params, H):
    out = _decoder_forward_jit(x, memory, src_mask, tgt_mask, params, H=H)
    # mirrors the module's display_shape print, outside the traced path
    print("shape after whole decoders: ", out.shape)
    return out


# ----------------------------- params / main --------------------------------

def init_params(key, N, D, D_FF):
    # QKV / KV weight fusion is done ONCE here (not re-concatenated per forward).
    def self_attn_params(k):
        ks = jax.random.split(k, 4)
        wq, wk, wv, wo = (0.1 * jax.random.normal(kk, (D, D), jnp.float32)
                          for kk in ks)
        return {"wqkv": jnp.concatenate([wq, wk, wv], axis=1),
                "bqkv": jnp.zeros((3 * D,), jnp.float32),
                "wo": wo, "bo": jnp.zeros((D,), jnp.float32)}

    def cross_attn_params(k):
        ks = jax.random.split(k, 4)
        wq, wk, wv, wo = (0.1 * jax.random.normal(kk, (D, D), jnp.float32)
                          for kk in ks)
        return {"wq": wq, "bq": jnp.zeros((D,), jnp.float32),
                "wkv": jnp.concatenate([wk, wv], axis=1),
                "bkv": jnp.zeros((2 * D,), jnp.float32),
                "wo": wo, "bo": jnp.zeros((D,), jnp.float32)}

    layers = []
    keys = jax.random.split(key, N + 1)
    for i in range(N):
        k_sa, k_ca, k_f1, k_f2 = jax.random.split(keys[i], 4)
        layers.append({
            "self_attn": self_attn_params(k_sa),
            "src_attn": cross_attn_params(k_ca),
            "ffn": {
                "w1": 0.1 * jax.random.normal(k_f1, (D, D_FF), jnp.float32),
                "b1": jnp.zeros((D_FF,), jnp.float32),
                "w2": 0.1 * jax.random.normal(k_f2, (D_FF, D), jnp.float32),
                "b2": jnp.zeros((D,), jnp.float32),
            },
            "ln0_a": jnp.ones((D,), jnp.float32), "ln0_b": jnp.zeros((D,), jnp.float32),
            "ln1_a": jnp.ones((D,), jnp.float32), "ln1_b": jnp.zeros((D,), jnp.float32),
            "ln2_a": jnp.ones((D,), jnp.float32), "ln2_b": jnp.zeros((D,), jnp.float32),
        })
    return {
        "layers": layers,
        "norm_a": jnp.ones((D,), jnp.float32),
        "norm_b": jnp.zeros((D,), jnp.float32),
    }


if __name__ == "__main__":
    B, S_TGT, S_SRC, D, H, D_FF, N = 2, 8, 8, 32, 4, 64, 2

    key = jax.random.PRNGKey(0)
    k_x, k_m, k_p = jax.random.split(key, 3)
    x = jax.random.normal(k_x, (B, S_TGT, D), jnp.float32)
    memory = jax.random.normal(k_m, (B, S_SRC, D), jnp.float32)

    # tgt_mask: causal (subsequent) mask; src_mask: all positions visible.
    tgt_mask = jnp.broadcast_to(
        jnp.tril(jnp.ones((S_TGT, S_TGT), jnp.float32))[None], (B, S_TGT, S_TGT))
    src_mask = jnp.ones((B, S_TGT, S_SRC), jnp.float32)

    params = init_params(k_p, N, D, D_FF)

    out = decoder_forward(x, memory, src_mask, tgt_mask, params, H)
    jax.block_until_ready(out)
    assert out.shape == (B, S_TGT, D)
    assert bool(jnp.all(jnp.isfinite(out)))
    print("KERNEL_OK")
</pallas_src>

<mosaic_0001>
module attributes {stable_mosaic.version = 11 : i64} {
  func.func @_ln_matmul_kernel(%arg0: i32, %arg1: memref<16x32xf32, #tpu.memory_space<vmem>>, %arg2: memref<1x32xf32, #tpu.memory_space<vmem>>, %arg3: memref<1x32xf32, #tpu.memory_space<vmem>>, %arg4: memref<32x96xf32, #tpu.memory_space<vmem>>, %arg5: memref<1x96xf32, #tpu.memory_space<vmem>>, %arg6: memref<16x96xf32, #tpu.memory_space<vmem>>) attributes {dimension_semantics = [#tpu.dimension_semantics<parallel>], iteration_bounds = array<i64: 1>, scalar_prefetch = 0 : i64, scratch_operands = 0 : i64, tpu.core_type = #tpu.core_type<tc>, window_params = [{transform_indices = @transform_0, window_bounds = array<i64: 16, 32>}, {pipeline_mode = #tpu.pipeline_mode<synchronous>, transform_indices = @transform_1, window_bounds = array<i64: 1, 32>}, {pipeline_mode = #tpu.pipeline_mode<synchronous>, transform_indices = @transform_2, window_bounds = array<i64: 1, 32>}, {pipeline_mode = #tpu.pipeline_mode<synchronous>, transform_indices = @transform_3, window_bounds = array<i64: 32, 96>}, {pipeline_mode = #tpu.pipeline_mode<synchronous>, transform_indices = @transform_4, window_bounds = array<i64: 1, 96>}, {transform_indices = @transform_5, window_bounds = array<i64: 16, 96>}]} {
    %c0 = arith.constant 0 : index
    %c0_0 = arith.constant 0 : index
    %0 = vector.load %arg1[%c0, %c0_0] : memref<16x32xf32, #tpu.memory_space<vmem>>, vector<16x32xf32>
    %c0_1 = arith.constant 0 : index
    %c0_2 = arith.constant 0 : index
    %1 = vector.load %arg2[%c0_1, %c0_2] : memref<1x32xf32, #tpu.memory_space<vmem>>, vector<1x32xf32>
    %c0_3 = arith.constant 0 : index
    %c0_4 = arith.constant 0 : index
    %2 = vector.load %arg3[%c0_3, %c0_4] : memref<1x32xf32, #tpu.memory_space<vmem>>, vector<1x32xf32>
    %cst = arith.constant dense<0.000000e+00> : vector<16xf32>
    %3 = vector.multi_reduction <add>, %0, %cst [1] : vector<16x32xf32> to vector<16xf32>
    %4 = vector.shape_cast %3 : vector<16xf32> to vector<16x1xf32>
    %cst_5 = arith.constant 3.200000e+01 : f32
    %5 = vector.broadcast %cst_5 : f32 to vector<16x1xf32>
    %6 = arith.divf %4, %5 : vector<16x1xf32>
    %7 = vector.broadcast %6 : vector<16x1xf32> to vector<16x32xf32>
    %8 = arith.subf %0, %7 : vector<16x32xf32>
    %9 = arith.mulf %8, %8 : vector<16x32xf32>
    %cst_6 = arith.constant dense<0.000000e+00> : vector<16xf32>
    %10 = vector.multi_reduction <add>, %9, %cst_6 [1] : vector<16x32xf32> to vector<16xf32>
    %11 = vector.shape_cast %10 : vector<16xf32> to vector<16x1xf32>
    %cst_7 = arith.constant 0.0322580636 : f32
    %12 = vector.broadcast %cst_7 : f32 to vector<16x1xf32>
    %13 = arith.mulf %11, %12 : vector<16x1xf32>
    %14 = math.sqrt %13 : vector<16x1xf32>
    %cst_8 = arith.constant 9.99999997E-7 : f32
    %15 = vector.broadcast %cst_8 : f32 to vector<16x1xf32>
    %16 = arith.addf %14, %15 : vector<16x1xf32>
    %17 = tpu.reciprocal %16 {approx = true} : vector<16x1xf32> -> vector<16x1xf32>
    %18 = vector.broadcast %1 : vector<1x32xf32> to vector<16x32xf32>
    %19 = arith.mulf %18, %8 : vector<16x32xf32>
    %20 = vector.broadcast %17 : vector<16x1xf32> to vector<16x32xf32>
    %21 = arith.mulf %19, %20 : vector<16x32xf32>
    %22 = vector.broadcast %2 : vector<1x32xf32> to vector<16x32xf32>
    %23 = arith.addf %21, %22 : vector<16x32xf32>
    %c0_9 = arith.constant 0 : index
    %c0_10 = arith.constant 0 : index
    %24 = vector.load %arg4[%c0_9, %c0_10] : memref<32x96xf32, #tpu.memory_space<vmem>>, vector<32x96xf32>
    %cst_11 = arith.constant dense<0.000000e+00> : vector<16x96xf32>
    %25 = tpu.matmul %23, %24, %cst_11 {dimension_numbers = #tpu.dot_dimension_numbers<[1], [0], [0], [1], [0, 0, 1, 1], [], []>} : vector<16x32xf32>, vector<32x96xf32>, vector<16x96xf32> -> vector<16x96xf32>
    %c0_12 = arith.constant 0 : index
    %c0_13 = arith.constant 0 : index
    %26 = vector.load %arg5[%c0_12, %c0_13] : memref<1x96xf32, #tpu.memory_space<vmem>>, vector<1x96xf32>
    %27 = vector.broadcast %26 : vector<1x96xf32> to vector<16x96xf32>
    %28 = arith.addf %25, %27 : vector<16x96xf32>
    %c0_14 = arith.constant 0 : index
    %c0_15 = arith.constant 0 : index
    %29 = vector.load %arg6[%c0_14, %c0_15] : memref<16x96xf32, #tpu.memory_space<vmem>>, vector<16x96xf32>
    tpu.vector_store %arg6[%c0_14, %c0_15], %28 {strides = array<i32>} : memref<16x96xf32, #tpu.memory_space<vmem>>, vector<16x96xf32>,
    return
  }
  func.func @transform_0(%arg0: i32) -> (i32, i32) {
    %c0_i32 = arith.constant 0 : i32
    %c0_i32_0 = arith.constant 0 : i32
    return %arg0, %c0_i32 : i32, i32
  }
  func.func @transform_1(%arg0: i32) -> (i32, i32) {
    %c0_i32 = arith.constant 0 : i32
    %c0_i32_0 = arith.constant 0 : i32
    %c0_i32_1 = arith.constant 0 : i32
    return %c0_i32, %c0_i32_0 : i32, i32
  }
  func.func @transform_2(%arg0: i32) -> (i32, i32) {
    %c0_i32 = arith.constant 0 : i32
    %c0_i32_0 = arith.constant 0 : i32
    %c0_i32_1 = arith.constant 0 : i32
    return %c0_i32, %c0_i32_0 : i32, i32
  }
  func.func @transform_3(%arg0: i32) -> (i32, i32) {
    %c0_i32 = arith.constant 0 : i32
    %c0_i32_0 = arith.constant 0 : i32
    %c0_i32_1 = arith.constant 0 : i32
    return %c0_i32, %c0_i32_0 : i32, i32
  }
  func.func @transform_4(%arg0: i32) -> (i32, i32) {
    %c0_i32 = arith.constant 0 : i32
    %c0_i32_0 = arith.constant 0 : i32
    %c0_i32_1 = arith.constant 0 : i32
    return %c0_i32, %c0_i32_0 : i32, i32
  }
  func.func @transform_5(%arg0: i32) -> (i32, i32) {
    %c0_i32 = arith.constant 0 : i32
    %c0_i32_0 = arith.constant 0 : i32
    return %arg0, %c0_i32 : i32, i32
  }
}

module attributes {stable_mosaic.version = 11 : i64} {
  func.func @_attn_kernel(%arg0: i32, %arg1: i32, %arg2: i32, %arg3: memref<1x1x8x8xf32, #tpu.memory_space<vmem>>, %arg4: memref<1x1x8x8xf32, #tpu.memory_space<vmem>>, %arg5: memref<1x1x8x8xf32, #tpu.memory_space<vmem>>, %arg6: memref<1x8x8xi8, #tpu.memory_space<vmem>>, %arg7: memref<1x8x32xf32, #tpu.memory_space<vmem>>, %arg8: memref<1x32xf32, #tpu.memory_space<vmem>>, %arg9: memref<1x8x32xf32, #tpu.memory_space<vmem>>, %arg10: memref<1x8x32xf32, #tpu.memory_space<vmem>>, %arg11: memref<8x32xf32, #tpu.memory_space<vmem>>) attributes {dimension_semantics = [#tpu.dimension_semantics<parallel>, #tpu.dimension_semantics<parallel>, #tpu.dimension_semantics<arbitrary>], iteration_bounds = array<i64: 2, 1, 4>, scalar_prefetch = 0 : i64, scratch_operands = 1 : i64, tpu.core_type = #tpu.core_type<tc>, window_params = [{transform_indices = @transform_0, window_bounds = array<i64: 1, 1, 8, 8>}, {transform_indices = @transform_1, window_bounds = array<i64: 1, 1, 8, 8>}, {transform_indices = @transform_2, window_bounds = array<i64: 1, 1, 8, 8>}, {transform_indices = @transform_3, window_bounds = array<i64: 1, 8, 8>}, {transform_indices = @transform_4, window_bounds = array<i64: 1, 8, 32>}, {pipeline_mode = #tpu.pipeline_mode<synchronous>, transform_indices = @transform_5, window_bounds = array<i64: 1, 32>}, {transform_indices = @transform_6, window_bounds = array<i64: 1, 8, 32>}, {transform_indices = @transform_7, window_bounds = array<i64: 1, 8, 32>}]} {
    %c0 = arith.constant 0 : index
    %c0_0 = arith.constant 0 : index
    %c0_1 = arith.constant 0 : index
    %c0_2 = arith.constant 0 : index
    %0 = vector.load %arg3[%c0, %c0_0, %c0_1, %c0_2] : memref<1x1x8x8xf32, #tpu.memory_space<vmem>>, vector<1x1x8x8xf32>
    %1 = vector.shape_cast %0 : vector<1x1x8x8xf32> to vector<8x8xf32>
    %c0_3 = arith.constant 0 : index
    %c0_4 = arith.constant 0 : index
    %c0_5 = arith.constant 0 : index
    %c0_6 = arith.constant 0 : index
    %2 = vector.load %arg4[%c0_3, %c0_4, %c0_5, %c0_6] : memref<1x1x8x8xf32, #tpu.memory_space<vmem>>, vector<1x1x8x8xf32>
    %3 = vector.shape_cast %2 : vector<1x1x8x8xf32> to vector<8x8xf32>
    %c0_7 = arith.constant 0 : index
    %c0_8 = arith.constant 0 : index
    %c0_9 = arith.constant 0 : index
    %c0_10 = arith.constant 0 : index
    %4 = vector.load %arg5[%c0_7, %c0_8, %c0_9, %c0_10] : memref<1x1x8x8xf32, #tpu.memory_space<vmem>>, vector<1x1x8x8xf32>
    %5 = vector.shape_cast %4 : vector<1x1x8x8xf32> to vector<8x8xf32>
    %cst = arith.constant dense<0.000000e+00> : vector<8x8xf32>
    %6 = tpu.matmul %1, %3, %cst {dimension_numbers = #tpu.dot_dimension_numbers<[1], [1], [0], [0], [0, 0, 1, 0], [], []>} : vector<8x8xf32>, vector<8x8xf32>, vector<8x8xf32> -> vector<8x8xf32>
    %cst_11 = arith.constant 0.353553385 : f32
    %7 = vector.broadcast %cst_11 : f32 to vector<8x8xf32>
    %8 = arith.mulf %6, %7 : vector<8x8xf32>
    %c0_12 = arith.constant 0 : index
    %c0_13 = arith.constant 0 : index
    %c0_14 = arith.constant 0 : index
    %9 = vector.load %arg6[%c0_12, %c0_13, %c0_14] : memref<1x8x8xi8, #tpu.memory_space<vmem>>, vector<1x8x8xi8>
    %10 = vector.shape_cast %9 : vector<1x8x8xi8> to vector<8x8xi8>
    %c0_i8 = arith.constant 0 : i8
    %11 = vector.broadcast %c0_i8 : i8 to vector<8x8xi8>
    %12 = arith.cmpi ne, %10, %11 : vector<8x8xi8>
    %cst_15 = arith.constant -1.000000e+09 : f32
    %13 = vector.broadcast %cst_15 : f32 to vector<8x8xf32>
    %14 = arith.select %12, %8, %13 : vector<8x8xi1>, vector<8x8xf32>
    %cst_16 = arith.constant dense<0xFF800000> : vector<8xf32>
    %15 = vector.multi_reduction <maximumf>, %14, %cst_16 [1] : vector<8x8xf32> to vector<8xf32>
    %16 = vector.shape_cast %15 : vector<8xf32> to vector<8x1xf32>
    %17 = vector.broadcast %16 : vector<8x1xf32> to vector<8x8xf32>
    %18 = arith.subf %14, %17 : vector<8x8xf32>
    %19 = math.exp %18 : vector<8x8xf32>
    %cst_17 = arith.constant dense<0.000000e+00> : vector<8xf32>
    %20 = vector.multi_reduction <add>, %19, %cst_17 [1] : vector<8x8xf32> to vector<8xf32>
    %21 = vector.shape_cast %20 : vector<8xf32> to vector<8x1xf32>
    %cst_18 = arith.constant dense<0.000000e+00> : vector<8x8xf32>
    %22 = tpu.matmul %19, %5, %cst_18 {dimension_numbers = #tpu.dot_dimension_numbers<[1], [0], [0], [1], [0, 0, 1, 1], [], []>} : vector<8x8xf32>, vector<8x8xf32>, vector<8x8xf32> -> vector<8x8xf32>
    %23 = tpu.reciprocal %21 {approx = true} : vector<8x1xf32> -> vector<8x1xf32>
    %24 = vector.broadcast %23 : vector<8x1xf32> to vector<8x8xf32>
    %25 = arith.mulf %22, %24 : vector<8x8xf32>
    %c0_19 = arith.constant 0 : index
    %c0_20 = arith.constant 0 : index
    %c0_21 = arith.constant 0 : index
    %26 = vector.load %arg7[%c0_19, %c0_20, %c0_21] : memref<1x8x32xf32, #tpu.memory_space<vmem>>, vector<1x8x32xf32>
    %27 = vector.shape_cast %26 : vector<1x8x32xf32> to vector<8x32xf32>
    %cst_22 = arith.constant dense<0.000000e+00> : vector<8x32xf32>
    %28 = tpu.matmul %25, %27, %cst_22 {dimension_numbers = #tpu.dot_dimension_numbers<[1], [0], [0], [1], [0, 0, 1, 1], [], []>} : vector<8x8xf32>, vector<8x32xf32>, vector<8x32xf32> -> vector<8x32xf32>
    %c0_i32 = arith.constant 0 : i32
    %29 = arith.cmpi eq, %arg2, %c0_i32 : i32
    %30 = arith.extui %29 : i1 to i32
    %c0_i32_23 = arith.constant 0 : i32
    %31 = arith.cmpi ne, %30, %c0_i32_23 : i32
    scf.if %31 {
      %c0_29 = arith.constant 0 : index
      %c0_30 = arith.constant 0 : index
      %c0_31 = arith.constant 0 : index
      %38 = vector.load %arg9[%c0_29, %c0_30, %c0_31] : memref<1x8x32xf32, #tpu.memory_space<vmem>>, vector<1x8x32xf32>
      %39 = vector.shape_cast %38 : vector<1x8x32xf32> to vector<8x32xf32>
      %c0_32 = arith.constant 0 : index
      %c0_33 = arith.constant 0 : index
      %40 = vector.load %arg8[%c0_32, %c0_33] : memref<1x32xf32, #tpu.memory_space<vmem>>, vector<1x32xf32>
      %41 = vector.broadcast %40 : vector<1x32xf32> to vector<8x32xf32>
      %42 = arith.addf %39, %41 : vector<8x32xf32>
      %c0_34 = arith.constant 0 : index
      %c0_35 = arith.constant 0 : index
      %43 = vector.load %arg11[%c0_34, %c0_35] : memref<8x32xf32, #tpu.memory_space<vmem>>, vector<8x32xf32>
      tpu.vector_store %arg11[%c0_34, %c0_35], %42 {strides = array<i32>} : memref<8x32xf32, #tpu.memory_space<vmem>>, vector<8x32xf32>,
    } else {
    }
    %c0_24 = arith.constant 0 : index
    %c0_25 = arith.constant 0 : index
    %32 = vector.load %arg11[%c0_24, %c0_25] : memref<8x32xf32, #tpu.memory_space<vmem>>, vector<8x32xf32>
    %33 = arith.addf %32, %28 : vector<8x32xf32>
    %c0_26 = arith.constant 0 : index
    %c0_27 = arith.constant 0 : index
    %34 = vector.load %arg11[%c0_26, %c0_27] : memref<8x32xf32, #tpu.memory_space<vmem>>, vector<8x32xf32>
    tpu.vector_store %arg11[%c0_26, %c0_27], %33 {strides = array<i32>} : memref<8x32xf32, #tpu.memory_space<vmem>>, vector<8x32xf32>,
    %c3_i32 = arith.constant 3 : i32
    %35 = arith.cmpi eq, %arg2, %c3_i32 : i32
    %36 = arith.extui %35 : i1 to i32
    %c0_i32_28 = arith.constant 0 : i32
    %37 = arith.cmpi ne, %36, %c0_i32_28 : i32
    scf.if %37 {
      %c0_29 = arith.constant 0 : index
      %c0_30 = arith.constant 0 : index
      %38 = vector.load %arg11[%c0_29, %c0_30] : memref<8x32xf32, #tpu.memory_space<vmem>>, vector<8x32xf32>
      %c0_31 = arith.constant 0 : index
      %c0_32 = arith.constant 0 : index
      %c0_33 = arith.constant 0 : index
      %39 = vector.load %arg10[%c0_31, %c0_32, %c0_33] : memref<1x8x32xf32, #tpu.memory_space<vmem>>, vector<1x8x32xf32>
      %40 = vector.shape_cast %39 : vector<1x8x32xf32> to vector<8x32xf32>
      %41 = vector.shape_cast %38 : vector<8x32xf32> to vector<1x8x32xf32>
      tpu.vector_store %arg10[%c0_31, %c0_32, %c0_33], %41 {strides = array<i32>} : memref<1x8x32xf32, #tpu.memory_space<vmem>>, vector<1x8x32xf32>,
    } else {
    }
    return
  }
  func.func @transform_0(%arg0: i32, %arg1: i32, %arg2: i32) -> (i32, i32, i32, i32) {
    %c0_i32 = arith.constant 0 : i32
    %c0_i32_0 = arith.constant 0 : i32
    return %arg0, %arg2, %arg1, %c0_i32 : i32, i32, i32, i32
  }
  func.func @transform_1(%arg0: i32, %arg1: i32, %arg2: i32) -> (i32, i32, i32, i32) {
    %c0_i32 = arith.constant 0 : i32
    %c0_i32_0 = arith.constant 0 : i32
    %c0_i32_1 = arith.constant 0 : i32
    return %arg0, %arg2, %c0_i32, %c0_i32_0 : i32, i32, i32, i32
  }
  func.func @transform_2(%arg0: i32, %arg1: i32, %arg2: i32) -> (i32, i32, i32, i32) {
    %c0_i32 = arith.constant 0 : i32
    %c0_i32_0 = arith.constant 0 : i32
    %c0_i32_1 = arith.constant 0 : i32
    return %arg0, %arg2, %c0_i32, %c0_i32_0 : i32, i32, i32, i32
  }
  func.func @transform_3(%arg0: i32, %arg1: i32, %arg2: i32) -> (i32, i32, i32) {
    %c0_i32 = arith.constant 0 : i32
    %c0_i32_0 = arith.constant 0 : i32
    return %arg0, %arg1, %c0_i32 : i32, i32, i32
  }
  func.func @transform_4(%arg0: i32, %arg1: i32, %arg2: i32) -> (i32, i32, i32) {
    %c0_i32 = arith.constant 0 : i32
    %c0_i32_0 = arith.constant 0 : i32
    %c0_i32_1 = arith.constant 0 : i32
    return %arg2, %c0_i32, %c0_i32_0 : i32, i32, i32
  }
  func.func @transform_5(%arg0: i32, %arg1: i32, %arg2: i32) -> (i32, i32) {
    %c0_i32 = arith.constant 0 : i32
    %c0_i32_0 = arith.constant 0 : i32
    %c0_i32_1 = arith.constant 0 : i32
    return %c0_i32, %c0_i32_0 : i32, i32
  }
  func.func @transform_6(%arg0: i32, %arg1: i32, %arg2: i32) -> (i32, i32, i32) {
    %c0_i32 = arith.constant 0 : i32
    %c0_i32_0 = arith.constant 0 : i32
    return %arg0, %arg1, %c0_i32 : i32, i32, i32
  }
  func.func @transform_7(%arg0: i32, %arg1: i32, %arg2: i32) -> (i32, i32, i32) {
    %c0_i32 = arith.constant 0 : i32
    %c0_i32_0 = arith.constant 0 : i32
    return %arg0, %arg1, %c0_i32 : i32, i32, i32
  }
}

module attributes {stable_mosaic.version = 11 : i64} {
  func.func @_ln_matmul_kernel(%arg0: i32, %arg1: memref<16x32xf32, #tpu.memory_space<vmem>>, %arg2: memref<1x32xf32, #tpu.memory_space<vmem>>, %arg3: memref<1x32xf32, #tpu.memory_space<vmem>>, %arg4: memref<32x32xf32, #tpu.memory_space<vmem>>, %arg5: memref<1x32xf32, #tpu.memory_space<vmem>>, %arg6: memref<16x32xf32, #tpu.memory_space<vmem>>) attributes {dimension_semantics = [#tpu.dimension_semantics<parallel>], iteration_bounds = array<i64: 1>, scalar_prefetch = 0 : i64, scratch_operands = 0 : i64, tpu.core_type = #tpu.core_type<tc>, window_params = [{transform_indices = @transform_0, window_bounds = array<i64: 16, 32>}, {pipeline_mode = #tpu.pipeline_mode<synchronous>, transform_indices = @transform_1, window_bounds = array<i64: 1, 32>}, {pipeline_mode = #tpu.pipeline_mode<synchronous>, transform_indices = @transform_2, window_bounds = array<i64: 1, 32>}, {pipeline_mode = #tpu.pipeline_mode<synchronous>, transform_indices = @transform_3, window_bounds = array<i64: 32, 32>}, {pipeline_mode = #tpu.pipeline_mode<synchronous>, transform_indices = @transform_4, window_bounds = array<i64: 1, 32>}, {transform_indices = @transform_5, window_bounds = array<i64: 16, 32>}]} {
    %c0 = arith.constant 0 : index
    %c0_0 = arith.constant 0 : index
    %0 = vector.load %arg1[%c0, %c0_0] : memref<16x32xf32, #tpu.memory_space<vmem>>, vector<16x32xf32>
    %c0_1 = arith.constant 0 : index
    %c0_2 = arith.constant 0 : index
    %1 = vector.load %arg2[%c0_1, %c0_2] : memref<1x32xf32, #tpu.memory_space<vmem>>, vector<1x32xf32>
    %c0_3 = arith.constant 0 : index
    %c0_4 = arith.constant 0 : index
    %2 = vector.load %arg3[%c0_3, %c0_4] : memref<1x32xf32, #tpu.memory_space<vmem>>, vector<1x32xf32>
    %cst = arith.constant dense<0.000000e+00> : vector<16xf32>
    %3 = vector.multi_reduction <add>, %0, %cst [1] : vector<16x32xf32> to vector<16xf32>
    %4 = vector.shape_cast %3 : vector<16xf32> to vector<16x1xf32>
    %cst_5 = arith.constant 3.200000e+01 : f32
    %5 = vector.broadcast %cst_5 : f32 to vector<16x1xf32>
    %6 = arith.divf %4, %5 : vector<16x1xf32>
    %7 = vector.broadcast %6 : vector<16x1xf32> to vector<16x32xf32>
    %8 = arith.subf %0, %7 : vector<16x32xf32>
    %9 = arith.mulf %8, %8 : vector<16x32xf32>
    %cst_6 = arith.constant dense<0.000000e+00> : vector<16xf32>
    %10 = vector.multi_reduction <add>, %9, %cst_6 [1] : vector<16x32xf32> to vector<16xf32>
    %11 = vector.shape_cast %10 : vector<16xf32> to vector<16x1xf32>
    %cst_7 = arith.constant 0.0322580636 : f32
    %12 = vector.broadcast %cst_7 : f32 to vector<16x1xf32>
    %13 = arith.mulf %11, %12 : vector<16x1xf32>
    %14 = math.sqrt %13 : vector<16x1xf32>
    %cst_8 = arith.constant 9.99999997E-7 : f32
    %15 = vector.broadcast %cst_8 : f32 to vector<16x1xf32>
    %16 = arith.addf %14, %15 : vector<16x1xf32>
    %17 = tpu.reciprocal %16 {approx = true} : vector<16x1xf32> -> vector<16x1xf32>
    %18 = vector.broadcast %1 : vector<1x32xf32> to vector<16x32xf32>
    %19 = arith.mulf %18, %8 : vector<16x32xf32>
    %20 = vector.broadcast %17 : vector<16x1xf32> to vector<16x32xf32>
    %21 = arith.mulf %19, %20 : vector<16x32xf32>
    %22 = vector.broadcast %2 : vector<1x32xf32> to vector<16x32xf32>
    %23 = arith.addf %21, %22 : vector<16x32xf32>
    %c0_9 = arith.constant 0 : index
    %c0_10 = arith.constant 0 : index
    %24 = vector.load %arg4[%c0_9, %c0_10] : memref<32x32xf32, #tpu.memory_space<vmem>>, vector<32x32xf32>
    %cst_11 = arith.constant dense<0.000000e+00> : vector<16x32xf32>
    %25 = tpu.matmul %23, %24, %cst_11 {dimension_numbers = #tpu.dot_dimension_numbers<[1], [0], [0], [1], [0, 0, 1, 1], [], []>} : vector<16x32xf32>, vector<32x32xf32>, vector<16x32xf32> -> vector<16x32xf32>
    %c0_12 = arith.constant 0 : index
    %c0_13 = arith.constant 0 : index
    %26 = vector.load %arg5[%c0_12, %c0_13] : memref<1x32xf32, #tpu.memory_space<vmem>>, vector<1x32xf32>
    %27 = vector.broadcast %26 : vector<1x32xf32> to vector<16x32xf32>
    %28 = arith.addf %25, %27 : vector<16x32xf32>
    %c0_14 = arith.constant 0 : index
    %c0_15 = arith.constant 0 : index
    %29 = vector.load %arg6[%c0_14, %c0_15] : memref<16x32xf32, #tpu.memory_space<vmem>>, vector<16x32xf32>
    tpu.vector_store %arg6[%c0_14, %c0_15], %28 {strides = array<i32>} : memref<16x32xf32, #tpu.memory_space<vmem>>, vector<16x32xf32>,
    return
  }
  func.func @transform_0(%arg0: i32) -> (i32, i32) {
    %c0_i32 = arith.constant 0 : i32
    %c0_i32_0 = arith.constant 0 : i32
    return %arg0, %c0_i32 : i32, i32
  }
  func.func @transform_1(%arg0: i32) -> (i32, i32) {
    %c0_i32 = arith.constant 0 : i32
    %c0_i32_0 = arith.constant 0 : i32
    %c0_i32_1 = arith.constant 0 : i32
    return %c0_i32, %c0_i32_0 : i32, i32
  }
  func.func @transform_2(%arg0: i32) -> (i32, i32) {
    %c0_i32 = arith.constant 0 : i32
    %c0_i32_0 = arith.constant 0 : i32
    %c0_i32_1 = arith.constant 0 : i32
    return %c0_i32, %c0_i32_0 : i32, i32
  }
  func.func @transform_3(%arg0: i32) -> (i32, i32) {
    %c0_i32 = arith.constant 0 : i32
    %c0_i32_0 = arith.constant 0 : i32
    %c0_i32_1 = arith.constant 0 : i32
    return %c0_i32, %c0_i32_0 : i32, i32
  }
  func.func @transform_4(%arg0: i32) -> (i32, i32) {
    %c0_i32 = arith.constant 0 : i32
    %c0_i32_0 = arith.constant 0 : i32
    %c0_i32_1 = arith.constant 0 : i32
    return %c0_i32, %c0_i32_0 : i32, i32
  }
  func.func @transform_5(%arg0: i32) -> (i32, i32) {
    %c0_i32 = arith.constant 0 : i32
    %c0_i32_0 = arith.constant 0 : i32
    return %arg0, %c0_i32 : i32, i32
  }
}

module attributes {stable_mosaic.version = 11 : i64} {
  func.func @_matmul_kernel(%arg0: i32, %arg1: memref<16x32xf32, #tpu.memory_space<vmem>>, %arg2: memref<32x64xf32, #tpu.memory_space<vmem>>, %arg3: memref<1x64xf32, #tpu.memory_space<vmem>>, %arg4: memref<16x64xf32, #tpu.memory_space<vmem>>) attributes {dimension_semantics = [#tpu.dimension_semantics<parallel>], iteration_bounds = array<i64: 1>, scalar_prefetch = 0 : i64, scratch_operands = 0 : i64, tpu.core_type = #tpu.core_type<tc>, window_params = [{transform_indices = @transform_0, window_bounds = array<i64: 16, 32>}, {pipeline_mode = #tpu.pipeline_mode<synchronous>, transform_indices = @transform_1, window_bounds = array<i64: 32, 64>}, {pipeline_mode = #tpu.pipeline_mode<synchronous>, transform_indices = @transform_2, window_bounds = array<i64: 1, 64>}, {transform_indices = @transform_3, window_bounds = array<i64: 16, 64>}]} {
    %c0 = arith.constant 0 : index
    %c0_0 = arith.constant 0 : index
    %0 = vector.load %arg1[%c0, %c0_0] : memref<16x32xf32, #tpu.memory_space<vmem>>, vector<16x32xf32>
    %c0_1 = arith.constant 0 : index
    %c0_2 = arith.constant 0 : index
    %1 = vector.load %arg2[%c0_1, %c0_2] : memref<32x64xf32, #tpu.memory_space<vmem>>, vector<32x64xf32>
    %cst = arith.constant dense<0.000000e+00> : vector<16x64xf32>
    %2 = tpu.matmul %0, %1, %cst {dimension_numbers = #tpu.dot_dimension_numbers<[1], [0], [0], [1], [0, 0, 1, 1], [], []>} : vector<16x32xf32>, vector<32x64xf32>, vector<16x64xf32> -> vector<16x64xf32>
    %c0_3 = arith.constant 0 : index
    %c0_4 = arith.constant 0 : index
    %3 = vector.load %arg3[%c0_3, %c0_4] : memref<1x64xf32, #tpu.memory_space<vmem>>, vector<1x64xf32>
    %4 = vector.broadcast %3 : vector<1x64xf32> to vector<16x64xf32>
    %5 = arith.addf %2, %4 : vector<16x64xf32>
    %c0_5 = arith.constant 0 : index
    %c0_6 = arith.constant 0 : index
    %6 = vector.load %arg4[%c0_5, %c0_6] : memref<16x64xf32, #tpu.memory_space<vmem>>, vector<16x64xf32>
    tpu.vector_store %arg4[%c0_5, %c0_6], %5 {strides = array<i32>} : memref<16x64xf32, #tpu.memory_space<vmem>>, vector<16x64xf32>,
    return
  }
  func.func @transform_0(%arg0: i32) -> (i32, i32) {
    %c0_i32 = arith.constant 0 : i32
    %c0_i32_0 = arith.constant 0 : i32
    return %arg0, %c0_i32 : i32, i32
  }
  func.func @transform_1(%arg0: i32) -> (i32, i32) {
    %c0_i32 = arith.constant 0 : i32
    %c0_i32_0 = arith.constant 0 : i32
    %c0_i32_1 = arith.constant 0 : i32
    return %c0_i32, %c0_i32_0 : i32, i32
  }
  func.func @transform_2(%arg0: i32) -> (i32, i32) {
    %c0_i32 = arith.constant 0 : i32
    %c0_i32_0 = arith.constant 0 : i32
    %c0_i32_1 = arith.constant 0 : i32
    return %c0_i32, %c0_i32_0 : i32, i32
  }
  func.func @transform_3(%arg0: i32) -> (i32, i32) {
    %c0_i32 = arith.constant 0 : i32
    %c0_i32_0 = arith.constant 0 : i32
    return %arg0, %c0_i32 : i32, i32
  }
}

module attributes {stable_mosaic.version = 11 : i64} {
  func.func @_ln_ffn_kernel(%arg0: i32, %arg1: i32, %arg2: memref<16x32xf32, #tpu.memory_space<vmem>>, %arg3: memref<1x32xf32, #tpu.memory_space<vmem>>, %arg4: memref<1x32xf32, #tpu.memory_space<vmem>>, %arg5: memref<32x64xf32, #tpu.memory_space<vmem>>, %arg6: memref<1x64xf32, #tpu.memory_space<vmem>>, %arg7: memref<64x32xf32, #tpu.memory_space<vmem>>, %arg8: memref<1x32xf32, #tpu.memory_space<vmem>>, %arg9: memref<16x32xf32, #tpu.memory_space<vmem>>, %arg10: memref<16x32xf32, #tpu.memory_space<vmem>>, %arg11: memref<16x32xf32, #tpu.memory_space<vmem>>) attributes {dimension_semantics = [#tpu.dimension_semantics<parallel>, #tpu.dimension_semantics<arbitrary>], iteration_bounds = array<i64: 1, 1>, scalar_prefetch = 0 : i64, scratch_operands = 2 : i64, tpu.core_type = #tpu.core_type<tc>, window_params = [{transform_indices = @transform_0, window_bounds = array<i64: 16, 32>}, {pipeline_mode = #tpu.pipeline_mode<synchronous>, transform_indices = @transform_1, window_bounds = array<i64: 1, 32>}, {pipeline_mode = #tpu.pipeline_mode<synchronous>, transform_indices = @transform_2, window_bounds = array<i64: 1, 32>}, {transform_indices = @transform_3, window_bounds = array<i64: 32, 64>}, {transform_indices = @transform_4, window_bounds = array<i64: 1, 64>}, {transform_indices = @transform_5, window_bounds = array<i64: 64, 32>}, {pipeline_mode = #tpu.pipeline_mode<synchronous>, transform_indices = @transform_6, window_bounds = array<i64: 1, 32>}, {transform_indices = @transform_7, window_bounds = array<i64: 16, 32>}]} {
    %c0_i32 = arith.constant 0 : i32
    %0 = arith.cmpi eq, %arg1, %c0_i32 : i32
    %1 = arith.extui %0 : i1 to i32
    %c0_i32_0 = arith.constant 0 : i32
    %2 = arith.cmpi ne, %1, %c0_i32_0 : i32
    scf.if %2 {
      %c0_16 = arith.constant 0 : index
      %c0_17 = arith.constant 0 : index
      %19 = vector.load %arg2[%c0_16, %c0_17] : memref<16x32xf32, #tpu.memory_space<vmem>>, vector<16x32xf32>
      %c0_18 = arith.constant 0 : index
      %c0_19 = arith.constant 0 : index
      %20 = vector.load %arg3[%c0_18, %c0_19] : memref<1x32xf32, #tpu.memory_space<vmem>>, vector<1x32xf32>
      %c0_20 = arith.constant 0 : index
      %c0_21 = arith.constant 0 : index
      %21 = vector.load %arg4[%c0_20, %c0_21] : memref<1x32xf32, #tpu.memory_space<vmem>>, vector<1x32xf32>
      %cst_22 = arith.constant dense<0.000000e+00> : vector<16xf32>
      %22 = vector.multi_reduction <add>, %19, %cst_22 [1] : vector<16x32xf32> to vector<16xf32>
      %23 = vector.shape_cast %22 : vector<16xf32> to vector<16x1xf32>
      %cst_23 = arith.constant 3.200000e+01 : f32
      %24 = vector.broadcast %cst_23 : f32 to vector<16x1xf32>
      %25 = arith.divf %23, %24 : vector<16x1xf32>
      %26 = vector.broadcast %25 : vector<16x1xf32> to vector<16x32xf32>
      %27 = arith.subf %19, %26 : vector<16x32xf32>
      %28 = arith.mulf %27, %27 : vector<16x32xf32>
      %cst_24 = arith.constant dense<0.000000e+00> : vector<16xf32>
      %29 = vector.multi_reduction <add>, %28, %cst_24 [1] : vector<16x32xf32> to vector<16xf32>
      %30 = vector.shape_cast %29 : vector<16xf32> to vector<16x1xf32>
      %cst_25 = arith.constant 0.0322580636 : f32
      %31 = vector.broadcast %cst_25 : f32 to vector<16x1xf32>
      %32 = arith.mulf %30, %31 : vector<16x1xf32>
      %33 = math.sqrt %32 : vector<16x1xf32>
      %cst_26 = arith.constant 9.99999997E-7 : f32
      %34 = vector.broadcast %cst_26 : f32 to vector<16x1xf32>
      %35 = arith.addf %33, %34 : vector<16x1xf32>
      %36 = tpu.reciprocal %35 {approx = true} : vector<16x1xf32> -> vector<16x1xf32>
      %37 = vector.broadcast %20 : vector<1x32xf32> to vector<16x32xf32>
      %38 = arith.mulf %37, %27 : vector<16x32xf32>
      %39 = vector.broadcast %36 : vector<16x1xf32> to vector<16x32xf32>
      %40 = arith.mulf %38, %39 : vector<16x32xf32>
      %41 = vector.broadcast %21 : vector<1x32xf32> to vector<16x32xf32>
      %42 = arith.addf %40, %41 : vector<16x32xf32>
      %c0_27 = arith.constant 0 : index
      %c0_28 = arith.constant 0 : index
      %43 = vector.load %arg10[%c0_27, %c0_28] : memref<16x32xf32, #tpu.memory_space<vmem>>, vector<16x32xf32>
      tpu.vector_store %arg10[%c0_27, %c0_28], %42 {strides = array<i32>} : memref<16x32xf32, #tpu.memory_space<vmem>>, vector<16x32xf32>,
      %c0_29 = arith.constant 0 : index
      %c0_30 = arith.constant 0 : index
      %44 = vector.load %arg8[%c0_29, %c0_30] : memref<1x32xf32, #tpu.memory_space<vmem>>, vector<1x32xf32>
      %45 = vector.broadcast %44 : vector<1x32xf32> to vector<16x32xf32>
      %46 = arith.addf %19, %45 : vector<16x32xf32>
      %c0_31 = arith.constant 0 : index
      %c0_32 = arith.constant 0 : index
      %47 = vector.load %arg11[%c0_31, %c0_32] : memref<16x32xf32, #tpu.memory_space<vmem>>, vector<16x32xf32>
      tpu.vector_store %arg11[%c0_31, %c0_32], %46 {strides = array<i32>} : memref<16x32xf32, #tpu.memory_space<vmem>>, vector<16x32xf32>,
    } else {
    }
    %c0 = arith.constant 0 : index
    %c0_1 = arith.constant 0 : index
    %3 = vector.load %arg10[%c0, %c0_1] : memref<16x32xf32, #tpu.memory_space<vmem>>, vector<16x32xf32>
    %c0_2 = arith.constant 0 : index
    %c0_3 = arith.constant 0 : index
    %4 = vector.load %arg5[%c0_2, %c0_3] : memref<32x64xf32, #tpu.memory_space<vmem>>, vector<32x64xf32>
    %cst = arith.constant dense<0.000000e+00> : vector<16x64xf32>
    %5 = tpu.matmul %3, %4, %cst {dimension_numbers = #tpu.dot_dimension_numbers<[1], [0], [0], [1], [0, 0, 1, 1], [], []>} : vector<16x32xf32>, vector<32x64xf32>, vector<16x64xf32> -> vector<16x64xf32>
    %c0_4 = arith.constant 0 : index
    %c0_5 = arith.constant 0 : index
    %6 = vector.load %arg6[%c0_4, %c0_5] : memref<1x64xf32, #tpu.memory_space<vmem>>, vector<1x64xf32>
    %7 = vector.broadcast %6 : vector<1x64xf32> to vector<16x64xf32>
    %8 = arith.addf %5, %7 : vector<16x64xf32>
    %cst_6 = arith.constant 0.000000e+00 : f32
    %9 = vector.broadcast %cst_6 : f32 to vector<16x64xf32>
    %10 = arith.maximumf %8, %9 : vector<16x64xf32>
    %c0_7 = arith.constant 0 : index
    %c0_8 = arith.constant 0 : index
    %11 = vector.load %arg11[%c0_7, %c0_8] : memref<16x32xf32, #tpu.memory_space<vmem>>, vector<16x32xf32>
    %c0_9 = arith.constant 0 : index
    %c0_10 = arith.constant 0 : index
    %12 = vector.load %arg7[%c0_9, %c0_10] : memref<64x32xf32, #tpu.memory_space<vmem>>, vector<64x32xf32>
    %cst_11 = arith.constant dense<0.000000e+00> : vector<16x32xf32>
    %13 = tpu.matmul %10, %12, %cst_11 {dimension_numbers = #tpu.dot_dimension_numbers<[1], [0], [0], [1], [0, 0, 1, 1], [], []>} : vector<16x64xf32>, vector<64x32xf32>, vector<16x32xf32> -> vector<16x32xf32>
    %14 = arith.addf %11, %13 : vector<16x32xf32>
    %c0_12 = arith.constant 0 : index
    %c0_13 = arith.constant 0 : index
    %15 = vector.load %arg11[%c0_12, %c0_13] : memref<16x32xf32, #tpu.memory_space<vmem>>, vector<16x32xf32>
    tpu.vector_store %arg11[%c0_12, %c0_13], %14 {strides = array<i32>} : memref<16x32xf32, #tpu.memory_space<vmem>>, vector<16x32xf32>,
    %c0_i32_14 = arith.constant 0 : i32
    %16 = arith.cmpi eq, %arg1, %c0_i32_14 : i32
    %17 = arith.extui %16 : i1 to i32
    %c0_i32_15 = arith.constant 0 : i32
    %18 = arith.cmpi ne, %17, %c0_i32_15 : i32
    scf.if %18 {
      %c0_16 = arith.constant 0 : index
      %c0_17 = arith.constant 0 : index
      %19 = vector.load %arg11[%c0_16, %c0_17] : memref<16x32xf32, #tpu.memory_space<vmem>>, vector<16x32xf32>
      %c0_18 = arith.constant 0 : index
      %c0_19 = arith.constant 0 : index
      %20 = vector.load %arg9[%c0_18, %c0_19] : memref<16x32xf32, #tpu.memory_space<vmem>>, vector<16x32xf32>
      tpu.vector_store %arg9[%c0_18, %c0_19], %19 {strides = array<i32>} : memref<16x32xf32, #tpu.memory_space<vmem>>, vector<16x32xf32>,
    } else {
    }
    return
  }
  func.func @transform_0(%arg0: i32, %arg1: i32) -> (i32, i32) {
    %c0_i32 = arith.constant 0 : i32
    %c0_i32_0 = arith.constant 0 : i32
    return %arg0, %c0_i32 : i32, i32
  }
  func.func @transform_1(%arg0: i32, %arg1: i32) -> (i32, i32) {
    %c0_i32 = arith.constant 0 : i32
    %c0_i32_0 = arith.constant 0 : i32
    %c0_i32_1 = arith.constant 0 : i32
    return %c0_i32, %c0_i32_0 : i32, i32
  }
  func.func @transform_2(%arg0: i32, %arg1: i32) -> (i32, i32) {
    %c0_i32 = arith.constant 0 : i32
    %c0_i32_0 = arith.constant 0 : i32
    %c0_i32_1 = arith.constant 0 : i32
    return %c0_i32, %c0_i32_0 : i32, i32
  }
  func.func @transform_3(%arg0: i32, %arg1: i32) -> (i32, i32) {
    %c0_i32 = arith.constant 0 : i32
    %c0_i32_0 = arith.constant 0 : i32
    return %c0_i32, %arg1 : i32, i32
  }
  func.func @transform_4(%arg0: i32, %arg1: i32) -> (i32, i32) {
    %c0_i32 = arith.constant 0 : i32
    %c0_i32_0 = arith.constant 0 : i32
    return %c0_i32, %arg1 : i32, i32
  }
  func.func @transform_5(%arg0: i32, %arg1: i32) -> (i32, i32) {
    %c0_i32 = arith.constant 0 : i32
    %c0_i32_0 = arith.constant 0 : i32
    return %arg1, %c0_i32 : i32, i32
  }
  func.func @transform_6(%arg0: i32, %arg1: i32) -> (i32, i32) {
    %c0_i32 = arith.constant 0 : i32
    %c0_i32_0 = arith.constant 0 : i32
    %c0_i32_1 = arith.constant 0 : i32
    return %c0_i32, %c0_i32_0 : i32, i32
  }
  func.func @transform_7(%arg0: i32, %arg1: i32) -> (i32, i32) {
    %c0_i32 = arith.constant 0 : i32
    %c0_i32_0 = arith.constant 0 : i32
    return %arg0, %c0_i32 : i32, i32
  }
}

module attributes {stable_mosaic.version = 11 : i64} {
  func.func @_ln_matmul_kernel(%arg0: i32, %arg1: memref<16x32xf32, #tpu.memory_space<vmem>>, %arg2: memref<1x32xf32, #tpu.memory_space<vmem>>, %arg3: memref<1x32xf32, #tpu.memory_space<vmem>>, %arg4: memref<32x96xf32, #tpu.memory_space<vmem>>, %arg5: memref<1x96xf32, #tpu.memory_space<vmem>>, %arg6: memref<16x96xf32, #tpu.memory_space<vmem>>) attributes {dimension_semantics = [#tpu.dimension_semantics<parallel>], iteration_bounds = array<i64: 1>, scalar_prefetch = 0 : i64, scratch_operands = 0 : i64, tpu.core_type = #tpu.core_type<tc>, window_params = [{transform_indices = @transform_0, window_bounds = array<i64: 16, 32>}, {pipeline_mode = #tpu.pipeline_mode<synchronous>, transform_indices = @transform_1, window_bounds = array<i64: 1, 32>}, {pipeline_mode = #tpu.pipeline_mode<synchronous>, transform_indices = @transform_2, window_bounds = array<i64: 1, 32>}, {pipeline_mode = #tpu.pipeline_mode<synchronous>, transform_indices = @transform_3, window_bounds = array<i64: 32, 96>}, {pipeline_mode = #tpu.pipeline_mode<synchronous>, transform_indices = @transform_4, window_bounds = array<i64: 1, 96>}, {transform_indices = @transform_5, window_bounds = array<i64: 16, 96>}]} {
    %c0 = arith.constant 0 : index
    %c0_0 = arith.constant 0 : index
    %0 = vector.load %arg1[%c0, %c0_0] : memref<16x32xf32, #tpu.memory_space<vmem>>, vector<16x32xf32>
    %c0_1 = arith.constant 0 : index
    %c0_2 = arith.constant 0 : index
    %1 = vector.load %arg2[%c0_1, %c0_2] : memref<1x32xf32, #tpu.memory_space<vmem>>, vector<1x32xf32>
    %c0_3 = arith.constant 0 : index
    %c0_4 = arith.constant 0 : index
    %2 = vector.load %arg3[%c0_3, %c0_4] : memref<1x32xf32, #tpu.memory_space<vmem>>, vector<1x32xf32>
    %cst = arith.constant dense<0.000000e+00> : vector<16xf32>
    %3 = vector.multi_reduction <add>, %0, %cst [1] : vector<16x32xf32> to vector<16xf32>
    %4 = vector.shape_cast %3 : vector<16xf32> to vector<16x1xf32>
    %cst_5 = arith.constant 3.200000e+01 : f32
    %5 = vector.broadcast %cst_5 : f32 to vector<16x1xf32>
    %6 = arith.divf %4, %5 : vector<16x1xf32>
    %7 = vector.broadcast %6 : vector<16x1xf32> to vector<16x32xf32>
    %8 = arith.subf %0, %7 : vector<16x32xf32>
    %9 = arith.mulf %8, %8 : vector<16x32xf32>
    %cst_6 = arith.constant dense<0.000000e+00> : vector<16xf32>
    %10 = vector.multi_reduction <add>, %9, %cst_6 [1] : vector<16x32xf32> to vector<16xf32>
    %11 = vector.shape_cast %10 : vector<16xf32> to vector<16x1xf32>
    %cst_7 = arith.constant 0.0322580636 : f32
    %12 = vector.broadcast %cst_7 : f32 to vector<16x1xf32>
    %13 = arith.mulf %11, %12 : vector<16x1xf32>
    %14 = math.sqrt %13 : vector<16x1xf32>
    %cst_8 = arith.constant 9.99999997E-7 : f32
    %15 = vector.broadcast %cst_8 : f32 to vector<16x1xf32>
    %16 = arith.addf %14, %15 : vector<16x1xf32>
    %17 = tpu.reciprocal %16 {approx = true} : vector<16x1xf32> -> vector<16x1xf32>
    %18 = vector.broadcast %1 : vector<1x32xf32> to vector<16x32xf32>
    %19 = arith.mulf %18, %8 : vector<16x32xf32>
    %20 = vector.broadcast %17 : vector<16x1xf32> to vector<16x32xf32>
    %21 = arith.mulf %19, %20 : vector<16x32xf32>
    %22 = vector.broadcast %2 : vector<1x32xf32> to vector<16x32xf32>
    %23 = arith.addf %21, %22 : vector<16x32xf32>
    %c0_9 = arith.constant 0 : index
    %c0_10 = arith.constant 0 : index
    %24 = vector.load %arg4[%c0_9, %c0_10] : memref<32x96xf32, #tpu.memory_space<vmem>>, vector<32x96xf32>
    %cst_11 = arith.constant dense<0.000000e+00> : vector<16x96xf32>
    %25 = tpu.matmul %23, %24, %cst_11 {dimension_numbers = #tpu.dot_dimension_numbers<[1], [0], [0], [1], [0, 0, 1, 1], [], []>} : vector<16x32xf32>, vector<32x96xf32>, vector<16x96xf32> -> vector<16x96xf32>
    %c0_12 = arith.constant 0 : index
    %c0_13 = arith.constant 0 : index
    %26 = vector.load %arg5[%c0_12, %c0_13] : memref<1x96xf32, #tpu.memory_space<vmem>>, vector<1x96xf32>
    %27 = vector.broadcast %26 : vector<1x96xf32> to vector<16x96xf32>
    %28 = arith.addf %25, %27 : vector<16x96xf32>
    %c0_14 = arith.constant 0 : index
    %c0_15 = arith.constant 0 : index
    %29 = vector.load %arg6[%c0_14, %c0_15] : memref<16x96xf32, #tpu.memory_space<vmem>>, vector<16x96xf32>
    tpu.vector_store %arg6[%c0_14, %c0_15], %28 {strides = array<i32>} : memref<16x96xf32, #tpu.memory_space<vmem>>, vector<16x96xf32>,
    return
  }
  func.func @transform_0(%arg0: i32) -> (i32, i32) {
    %c0_i32 = arith.constant 0 : i32
    %c0_i32_0 = arith.constant 0 : i32
    return %arg0, %c0_i32 : i32, i32
  }
  func.func @transform_1(%arg0: i32) -> (i32, i32) {
    %c0_i32 = arith.constant 0 : i32
    %c0_i32_0 = arith.constant 0 : i32
    %c0_i32_1 = arith.constant 0 : i32
    return %c0_i32, %c0_i32_0 : i32, i32
  }
  func.func @transform_2(%arg0: i32) -> (i32, i32) {
    %c0_i32 = arith.constant 0 : i32
    %c0_i32_0 = arith.constant 0 : i32
    %c0_i32_1 = arith.constant 0 : i32
    return %c0_i32, %c0_i32_0 : i32, i32
  }
  func.func @transform_3(%arg0: i32) -> (i32, i32) {
    %c0_i32 = arith.constant 0 : i32
    %c0_i32_0 = arith.constant 0 : i32
    %c0_i32_1 = arith.constant 0 : i32
    return %c0_i32, %c0_i32_0 : i32, i32
  }
  func.func @transform_4(%arg0: i32) -> (i32, i32) {
    %c0_i32 = arith.constant 0 : i32
    %c0_i32_0 = arith.constant 0 : i32
    %c0_i32_1 = arith.constant 0 : i32
    return %c0_i32, %c0_i32_0 : i32, i32
  }
  func.func @transform_5(%arg0: i32) -> (i32, i32) {
    %c0_i32 = arith.constant 0 : i32
    %c0_i32_0 = arith.constant 0 : i32
    return %arg0, %c0_i32 : i32, i32
  }
}

module attributes {stable_mosaic.version = 11 : i64} {
  func.func @_layernorm_kernel(%arg0: i32, %arg1: memref<16x32xf32, #tpu.memory_space<vmem>>, %arg2: memref<1x32xf32, #tpu.memory_space<vmem>>, %arg3: memref<1x32xf32, #tpu.memory_space<vmem>>, %arg4: memref<16x32xf32, #tpu.memory_space<vmem>>) attributes {dimension_semantics = [#tpu.dimension_semantics<parallel>], iteration_bounds = array<i64: 1>, scalar_prefetch = 0 : i64, scratch_operands = 0 : i64, tpu.core_type = #tpu.core_type<tc>, window_params = [{transform_indices = @transform_0, window_bounds = array<i64: 16, 32>}, {pipeline_mode = #tpu.pipeline_mode<synchronous>, transform_indices = @transform_1, window_bounds = array<i64: 1, 32>}, {pipeline_mode = #tpu.pipeline_mode<synchronous>, transform_indices = @transform_2, window_bounds = array<i64: 1, 32>}, {transform_indices = @transform_3, window_bounds = array<i64: 16, 32>}]} {
    %c0 = arith.constant 0 : index
    %c0_0 = arith.constant 0 : index
    %0 = vector.load %arg1[%c0, %c0_0] : memref<16x32xf32, #tpu.memory_space<vmem>>, vector<16x32xf32>
    %c0_1 = arith.constant 0 : index
    %c0_2 = arith.constant 0 : index
    %1 = vector.load %arg2[%c0_1, %c0_2] : memref<1x32xf32, #tpu.memory_space<vmem>>, vector<1x32xf32>
    %c0_3 = arith.constant 0 : index
    %c0_4 = arith.constant 0 : index
    %2 = vector.load %arg3[%c0_3, %c0_4] : memref<1x32xf32, #tpu.memory_space<vmem>>, vector<1x32xf32>
    %cst = arith.constant dense<0.000000e+00> : vector<16xf32>
    %3 = vector.multi_reduction <add>, %0, %cst [1] : vector<16x32xf32> to vector<16xf32>
    %4 = vector.shape_cast %3 : vector<16xf32> to vector<16x1xf32>
    %cst_5 = arith.constant 3.200000e+01 : f32
    %5 = vector.broadcast %cst_5 : f32 to vector<16x1xf32>
    %6 = arith.divf %4, %5 : vector<16x1xf32>
    %7 = vector.broadcast %6 : vector<16x1xf32> to vector<16x32xf32>
    %8 = arith.subf %0, %7 : vector<16x32xf32>
    %9 = arith.mulf %8, %8 : vector<16x32xf32>
    %cst_6 = arith.constant dense<0.000000e+00> : vector<16xf32>
    %10 = vector.multi_reduction <add>, %9, %cst_6 [1] : vector<16x32xf32> to vector<16xf32>
    %11 = vector.shape_cast %10 : vector<16xf32> to vector<16x1xf32>
    %cst_7 = arith.constant 0.0322580636 : f32
    %12 = vector.broadcast %cst_7 : f32 to vector<16x1xf32>
    %13 = arith.mulf %11, %12 : vector<16x1xf32>
    %14 = math.sqrt %13 : vector<16x1xf32>
    %cst_8 = arith.constant 9.99999997E-7 : f32
    %15 = vector.broadcast %cst_8 : f32 to vector<16x1xf32>
    %16 = arith.addf %14, %15 : vector<16x1xf32>
    %17 = tpu.reciprocal %16 {approx = true} : vector<16x1xf32> -> vector<16x1xf32>
    %18 = vector.broadcast %1 : vector<1x32xf32> to vector<16x32xf32>
    %19 = arith.mulf %18, %8 : vector<16x32xf32>
    %20 = vector.broadcast %17 : vector<16x1xf32> to vector<16x32xf32>
    %21 = arith.mulf %19, %20 : vector<16x32xf32>
    %22 = vector.broadcast %2 : vector<1x32xf32> to vector<16x32xf32>
    %23 = arith.addf %21, %22 : vector<16x32xf32>
    %c0_9 = arith.constant 0 : index
    %c0_10 = arith.constant 0 : index
    %24 = vector.load %arg4[%c0_9, %c0_10] : memref<16x32xf32, #tpu.memory_space<vmem>>, vector<16x32xf32>
    tpu.vector_store %arg4[%c0_9, %c0_10], %23 {strides = array<i32>} : memref<16x32xf32, #tpu.memory_space<vmem>>, vector<16x32xf32>,
    return
  }
  func.func @transform_0(%arg0: i32) -> (i32, i32) {
    %c0_i32 = arith.constant 0 : i32
    %c0_i32_0 = arith.constant 0 : i32
    return %arg0, %c0_i32 : i32, i32
  }
  func.func @transform_1(%arg0: i32) -> (i32, i32) {
    %c0_i32 = arith.constant 0 : i32
    %c0_i32_0 = arith.constant 0 : i32
    %c0_i32_1 = arith.constant 0 : i32
    return %c0_i32, %c0_i32_0 : i32, i32
  }
  func.func @transform_2(%arg0: i32) -> (i32, i32) {
    %c0_i32 = arith.constant 0 : i32
    %c0_i32_0 = arith.constant 0 : i32
    %c0_i32_1 = arith.constant 0 : i32
    return %c0_i32, %c0_i32_0 : i32, i32
  }
  func.func @transform_3(%arg0: i32) -> (i32, i32) {
    %c0_i32 = arith.constant 0 : i32
    %c0_i32_0 = arith.constant 0 : i32
    return %arg0, %c0_i32 : i32, i32
  }
}

</mosaic_0001>

<llo_original>
// kernel: _decoder_forward_jit.16
$region0: #{_decoder_forward_jit.16}
  #allocation0 [shape = 'u32[]', space=smem, size = 0x4, offset = 0x4, fixed_abs, tag = 'smem constant byte address 0x4 - core index']
  #allocation1 [shape = 'u32[72,128]{1,0:T(1,128)}', space=vmem, size = 0x9000, scoped, tag = 'internal scratch']
  %s0 = inlined_call_operand.vmem [shape: f32[16,32], index: 0, kind: input, shape index: {}]
  %s1 = inlined_call_operand.vmem [shape: f32[32,64], index: 1, kind: input, shape index: {}]
  %s2 = inlined_call_operand.vmem [shape: f32[1,64], index: 2, kind: input, shape index: {}]
  %s3 = inlined_call_operand.vmem [shape: f32[16,64], index: 3, kind: output, shape index: {}]
  %s4 = sld [smem:[#allocation0]]
  $region22: #{_decoder_forward_jit.16} parent=0
    _
  %s6 = ssub.s32 1, %s4
  %s7 = scalar_select 0, %s6, %s4
  // Predicated region
  $region2: #{_decoder_forward_jit.16} parent=0 // pred_check
    _
  $region3: #{_decoder_forward_jit.16} parent=0 // pred_check_branch
    %9 = sbr.rel (0) target = $region5
  $region4: #{_decoder_forward_jit.16} parent=0 // pred_region
    _
  $region5: #{_decoder_forward_jit.16} parent=0 // pred_fallthru
    _
  // Predicated region
  $region6: #{_decoder_forward_jit.16} parent=0 // pred_check
    _
  $region7: #{_decoder_forward_jit.16} parent=0 // pred_check_branch
    %11 = sbr.rel (0) target = $region9
  $region8: #{_decoder_forward_jit.16} parent=0 // pred_region
    _
  $region9: #{_decoder_forward_jit.16} parent=0 // pred_fallthru
    _
  // Predicated region
  $region10: #{_decoder_forward_jit.16} parent=0 // pred_check
    _
  $region11: #{_decoder_forward_jit.16} parent=0 // pred_check_branch
    %13 = sbr.rel (0) target = $region13
  $region12: #{_decoder_forward_jit.16} parent=0 // pred_region
    _
  $region13: #{_decoder_forward_jit.16} parent=0 // pred_fallthru
    _
  %v14 = vld [vmem:[%s0] sm:$0xff]
  %v15 = vld [vmem:[%s0 + $0x8] sm:$0xff]
  %v16 = vld [vmem:[%s1] sm:$0xff]
  %v17 = vld [vmem:[%s1 + $0x8] sm:$0xff]
  %v18 = vld [vmem:[%s1 + $0x10] sm:$0xff]
  %v19 = vld [vmem:[%s1 + $0x18] sm:$0xff]
  %v20 = vld [vmem:[%s2] sm:$0x1]
  %v22 = vperm.slane %v20, 0
  %vm24 = vcmask 261120
  %v26 = vsel %vm24, %v14, 0
  %v29 = vsel %vm24, %v15, 0
  %31 = vmatpush.msra.mxu0 0.0
  %32 = vmatpush.msra.mxu0 0.0
  %33 = vmatpush.msra.mxu0 0.0
  %34 = vmatpush.msra.mxu0 0.0
  %35 = vmatpush.msra.mxu0 0.0
  %36 = vmatpush.msra.mxu0 0.0
  %37 = vmatpush.msra.mxu0 0.0
  %38 = vmatpush.msra.mxu0 0.0
  %39 = vmatpush.msra.mxu0 0.0
  %40 = vmatpush.msra.mxu0 0.0
  %41 = vmatpush.msra.mxu0 0.0
  %42 = vmatpush.msra.mxu0 0.0
  %43 = vmatpush.msra.mxu0 %v19
  %44 = vmatpush.msra.mxu0 %v18
  %45 = vmatpush.msra.mxu0 %v17
  %46 = vmatpush.msra.mxu0 %v16
  %47 = vmatmul.f32.gmra.mxu0 %v26
  %v48 = vpop.f32.mrf.mxu0
  %v49 = vadd.f32 %v22, %v48
  %50 = vmatmul.f32.gmra.mxu0 %v29
  %v51 = vpop.f32.mrf.mxu0
  %v52 = vadd.f32 %v22, %v51
  %53 = vdwg.mxu0
  %vm54 = vcmask 523264
  %55 = vst.msk [vmem:[%s3] sm:$0xff] %vm54, %v49
  %56 = vst.msk [vmem:[%s3 + $0x8] sm:$0xff] %vm54, %v52
  // Predicated region
  $region14: #{_decoder_forward_jit.16} parent=0 // pred_check
    _
  $region15: #{_decoder_forward_jit.16} parent=0 // pred_check_branch
    %58 = sbr.rel (0) target = $region17
  $region16: #{_decoder_forward_jit.16} parent=0 // pred_region
    _
  $region17: #{_decoder_forward_jit.16} parent=0 // pred_fallthru
    _
  // Predicated region
  $region18: #{_decoder_forward_jit.16} parent=0 // pred_check
    _
  $region19: #{_decoder_forward_jit.16} parent=0 // pred_check_branch
    %60 = sbr.rel (0) target = $region21
  $region20: #{_decoder_forward_jit.16} parent=0 // pred_region
    _
  $region21: #{_decoder_forward_jit.16} parent=0 // pred_fallthru
    _

// kernel: _decoder_forward_jit.13
$region0: #{_decoder_forward_jit.13}
  #allocation0 [shape = 'u32[]', space=smem, size = 0x4, offset = 0x4, fixed_abs, tag = 'smem constant byte address 0x4 - core index']
  #allocation1 [shape = 'u32[72,128]{1,0:T(1,128)}', space=vmem, size = 0x9000, scoped, tag = 'internal scratch']
  %s0 = inlined_call_operand.hbm [shape: f32[16,32], index: 0, kind: input, shape index: {}]
  %s1 = inlined_call_operand.vmem [shape: f32[1,32], index: 1, kind: input, shape index: {}]
  %s2 = inlined_call_operand.vmem [shape: f32[1,32], index: 2, kind: input, shape index: {}]
  %s3 = inlined_call_operand.vmem [shape: f32[32,96], index: 3, kind: input, shape index: {}]
  %s4 = inlined_call_operand.vmem [shape: f32[1,96], index: 4, kind: input, shape index: {}]
  %s5 = inlined_call_operand.vmem [shape: f32[16,96], index: 5, kind: output, shape index: {}]
  %s6 = sld [smem:[#allocation0]]
  $region34: #{_decoder_forward_jit.13} parent=0
    _
  %s8 = ssub.s32 1, %s6
  %s9 = scalar_select 0, %s8, %s6
  $region1: #{_decoder_forward_jit.13} parent=0
    #allocation2 [shape = 'u8[8192]{0}', space=vmem, size = 0x2000, scoped, tag = 'input window, operand 0, single buffered']
    #allocation3 [shape = 's32[1]{0}', space=sflag, size = 0x4, scoped, tag = 'scoped memory for _decoder_forward_jit.13']
    %10 = vsyncpa [#allocation3], 0
    // Predicated region
    $region2: #{_decoder_forward_jit.13} parent=1 // pred_check
      _
    $region3: #{_decoder_forward_jit.13} parent=1 // pred_check_branch
      %12 = sbr.rel (0) target = $region5
    $region4: #{_decoder_forward_jit.13} parent=1 // pred_region
      %14 = vsyncadd [#allocation3], 0
      %s15 = sshll.u32 %s0, 4
      %s16 = int_to_ptr.hbm [resolvable:$true] %s15
      %s17 = sshll.u32 [#allocation2], 4
      %s18 = int_to_ptr.vmem [resolvable:$true] %s17
      %23 = dma.hbm_to_vmem [thread:$0]  %s16, 256, %s18, [#allocation3], 128, 128, 8
    $region5: #{_decoder_forward_jit.13} parent=1 // pred_fallthru
      _
    // Predicated region
    $region6: #{_decoder_forward_jit.13} parent=1 // pred_check
      _
    $region7: #{_decoder_forward_jit.13} parent=1 // pred_check_branch
      %25 = sbr.rel (0) target = $region9
    $region8: #{_decoder_forward_jit.13} parent=1 // pred_region
      _
    $region9: #{_decoder_forward_jit.13} parent=1 // pred_fallthru
      _
    // Predicated region
    $region10: #{_decoder_forward_jit.13} parent=1 // pred_check
      _
    $region11: #{_decoder_forward_jit.13} parent=1 // pred_check_branch
      %27 = sbr.rel (0) target = $region13
    $region12: #{_decoder_forward_jit.13} parent=1 // pred_region
      _
    $region13: #{_decoder_forward_jit.13} parent=1 // pred_fallthru
      _
    // Predicated region
    $region14: #{_decoder_forward_jit.13} parent=1 // pred_check
      _
    $region15: #{_decoder_forward_jit.13} parent=1 // pred_check_branch
      %29 = sbr.rel (0) target = $region17
    $region16: #{_decoder_forward_jit.13} parent=1 // pred_region
      _
    $region17: #{_decoder_forward_jit.13} parent=1 // pred_fallthru
      _
    // Predicated region
    $region18: #{_decoder_forward_jit.13} parent=1 // pred_check
      _
    $region19: #{_decoder_forward_jit.13} parent=1 // pred_check_branch
      %31 = sbr.rel (0) target = $region21
    $region20: #{_decoder_forward_jit.13} parent=1 // pred_region
      _
    $region21: #{_decoder_forward_jit.13} parent=1 // pred_fallthru
      _
    // Predicated region
    $region22: #{_decoder_forward_jit.13} parent=1 // pred_check
      _
    $region23: #{_decoder_forward_jit.13} parent=1 // pred_check_branch
      %33 = sbr.rel (0) target = $region25
    $region24: #{_decoder_forward_jit.13} parent=1 // pred_region
      %35 = dma.done [#allocation3], 256
    $region25: #{_decoder_forward_jit.13} parent=1 // pred_fallthru
      _
    %v36 = vld [vmem:[#allocation2] sm:$0xff]
    %v37 = vld [vmem:[#allocation2 + $0x8] sm:$0xff]
    %v38 = vld [vmem:[%s1] sm:$0x1]
    %v39 = vld [vmem:[%s2] sm:$0x1]
    %vm40 = vcmask 261120
    %v41 = vsel %vm40, %v36, 0.0
    %42 = vadd.xlane.f32.xlu0 %v41
    %v43 = vpop.xlane.xlu0 %42
    %v44 = vsel %vm40, %v37, 0.0
    %45 = vadd.xlane.f32.xlu0 %v44
    %v46 = vpop.xlane.xlu0 %45
    %v47 = vrcp.pop 32.0
    %v48 = vmul.f32 32.0, %v47
    %v49 = vsub.f32 1.0, %v48
    %v50 = vmul.f32 %v47, %v49
    %v51 = vadd.f32 %v47, %v50
    %vm52 = vweird.f32 %v47
    %v53 = vsel %vm52, %v47, %v51
    %v54 = vmul.f32 %v43, %v53
    %v55 = vmul.f32 %v46, %v53
    %v56 = vsub.f32 %v36, %v54
    %v57 = vsub.f32 %v37, %v55
    %v58 = vmul.f32 %v56, %v56
    %v59 = vmul.f32 %v57, %v57
    %v60 = vsel %vm40, %v58, 0.0
    %61 = vadd.xlane.f32.xlu0 %v60
    %v62 = vpop.xlane.xlu0 %61
    %v63 = vsel %vm40, %v59, 0.0
    %64 = vadd.xlane.f32.xlu0 %v63
    %v65 = vpop.xlane.xlu0 %64
    %v66 = vmul.f32 %v62, 0.032258064
    %v67 = vmul.f32 %v65, 0.032258064
    %v68 = vrsqrt.pop %v66
    %v69 = vmul.f32 %v68, %v66
    %v70 = vmul.f32 %v69, %v68
    %v71 = vmul.f32 0.5, %v70
    %v72 = vsub.f32 1.5, %v71
    %v73 = vmul.f32 %v68, %v72
    %v74 = vmul.f32 %v66, %v73
    %vm75 = vcmp.eq.f32.partialorder %v66, inf
    %v76 = vsel %vm75, %v66, %v74
    %vm77 = vcmp.eq.f32.partialorder %v66, 0.0
    %v78 = vand.u32 %v66, 2147483648
    %v79 = vsel %vm77, %v78, %v76
    %v80 = vrsqrt.pop %v67
    %v81 = vmul.f32 %v80, %v67
    %v82 = vmul.f32 %v81, %v80
    %v83 = vmul.f32 0.5, %v82
    %v84 = vsub.f32 1.5, %v83
    %v85 = vmul.f32 %v80, %v84
    %v86 = vmul.f32 %v67, %v85
    %vm87 = vcmp.eq.f32.partialorder %v67, inf
    %v88 = vsel %vm87, %v67, %v86
    %vm89 = vcmp.eq.f32.partialorder %v67, 0.0
    %v90 = vand.u32 %v67, 2147483648
    %v91 = vsel %vm89, %v90, %v88
    %v92 = vadd.f32 %v79, 1e-06
    %v93 = vadd.f32 %v91, 1e-06
    %v94 = vrcp.pop %v92
    %v95 = vrcp.pop %v93
    %v97 = vperm.slane %v38, 0
    %v99 = vmul.f32 %v97, %v56
    %v100 = vmul.f32 %v97, %v57
    %v101 = vmul.f32 %v99, %v94
    %v102 = vmul.f32 %v100, %v95
    %v104 = vperm.slane %v39, 0
    %v106 = vadd.f32 %v101, %v104
    %v107 = vadd.f32 %v102, %v104
    %v108 = vld [vmem:[%s3] sm:$0xff]
    %v109 = vld [vmem:[%s3 + $0x8] sm:$0xff]
    %v110 = vld [vmem:[%s3 + $0x10] sm:$0xff]
    %v111 = vld [vmem:[%s3 + $0x18] sm:$0xff]
    %v112 = vld [vmem:[%s4] sm:$0x1]
    %v114 = vperm.slane %v112, 0
    %v117 = vsel %vm40, %v106, 0
    %v120 = vsel %vm40, %v107, 0
    %122 = vmatpush.msra.mxu0 0.0
    %123 = vmatpush.msra.mxu0 0.0
    %124 = vmatpush.msra.mxu0 0.0
    %125 = vmatpush.msra.mxu0 0.0
    %126 = vmatpush.msra.mxu0 0.0
    %127 = vmatpush.msra.mxu0 0.0
    %128 = vmatpush.msra.mxu0 0.0
    %129 = vmatpush.msra.mxu0 0.0
    %130 = vmatpush.msra.mxu0 0.0
    %131 = vmatpush.msra.mxu0 0.0
    %132 = vmatpush.msra.mxu0 0.0
    %133 = vmatpush.msra.mxu0 0.0
    %134 = vmatpush.msra.mxu0 %v111
    %135 = vmatpush.msra.mxu0 %v110
    %136 = vmatpush.msra.mxu0 %v109
    %137 = vmatpush.msra.mxu0 %v108
    %138 = vmatmul.f32.gmra.mxu0 %v117
    %v139 = vpop.f32.mrf.mxu0
    %v140 = vadd.f32 %v114, %v139
    %141 = vmatmul.f32.gmra.mxu0 %v120
    %v142 = vpop.f32.mrf.mxu0
    %v143 = vadd.f32 %v114, %v142
    %144 = vdwg.mxu0
    %vm145 = vcmask 785408
    %146 = vst.msk [vmem:[%s5] sm:$0xff] %vm145, %v140
    %147 = vst.msk [vmem:[%s5 + $0x8] sm:$0xff] %vm145, %v143
    // Predicated region
    $region26: #{_decoder_forward_jit.13} parent=1 // pred_check
      _
    $region27: #{_decoder_forward_jit.13} parent=1 // pred_check_branch
      %149 = sbr.rel (0) target = $region29
    $region28: #{_decoder_forward_jit.13} parent=1 // pred_region
      _
    $region29: #{_decoder_forward_jit.13} parent=1 // pred_fallthru
      _
    // Predicated region
    $region30: #{_decoder_forward_jit.13} parent=1 // pred_check
      _
    $region31: #{_decoder_forward_jit.13} parent=1 // pred_check_branch
      %151 = sbr.rel (0) target = $region33
    $region32: #{_decoder_forward_jit.13} parent=1 // pred_region
      _
    $region33: #{_decoder_forward_jit.13} parent=1 // pred_fallthru
      _
    %152 = vsyncpa [#allocation3], 1

// kernel: _decoder_forward_jit.15
$region0: #{_decoder_forward_jit.15}
  #allocation0 [shape = 'u32[]', space=smem, size = 0x4, offset = 0x4, fixed_abs, tag = 'smem constant byte address 0x4 - core index']
  #allocation1 [shape = 'u32[72,128]{1,0:T(1,128)}', space=vmem, size = 0x9000, scoped, tag = 'internal scratch']
  %s0 = inlined_call_operand.vmem [shape: f32[16,32], index: 0, kind: input, shape index: {}]
  %s1 = inlined_call_operand.vmem [shape: f32[1,32], index: 1, kind: input, shape index: {}]
  %s2 = inlined_call_operand.vmem [shape: f32[1,32], index: 2, kind: input, shape index: {}]
  %s3 = inlined_call_operand.vmem [shape: f32[32,32], index: 3, kind: input, shape index: {}]
  %s4 = inlined_call_operand.vmem [shape: f32[1,32], index: 4, kind: input, shape index: {}]
  %s5 = inlined_call_operand.vmem [shape: f32[16,32], index: 5, kind: output, shape index: {}]
  %s6 = sld [smem:[#allocation0]]
  $region30: #{_decoder_forward_jit.15} parent=0
    _
  %s8 = ssub.s32 1, %s6
  %s9 = scalar_select 0, %s8, %s6
  // Predicated region
  $region2: #{_decoder_forward_jit.15} parent=0 // pred_check
    _
  $region3: #{_decoder_forward_jit.15} parent=0 // pred_check_branch
    %11 = sbr.rel (0) target = $region5
  $region4: #{_decoder_forward_jit.15} parent=0 // pred_region
    _
  $region5: #{_decoder_forward_jit.15} parent=0 // pred_fallthru
    _
  // Predicated region
  $region6: #{_decoder_forward_jit.15} parent=0 // pred_check
    _
  $region7: #{_decoder_forward_jit.15} parent=0 // pred_check_branch
    %13 = sbr.rel (0) target = $region9
  $region8: #{_decoder_forward_jit.15} parent=0 // pred_region
    _
  $region9: #{_decoder_forward_jit.15} parent=0 // pred_fallthru
    _
  // Predicated region
  $region10: #{_decoder_forward_jit.15} parent=0 // pred_check
    _
  $region11: #{_decoder_forward_jit.15} parent=0 // pred_check_branch
    %15 = sbr.rel (0) target = $region13
  $region12: #{_decoder_forward_jit.15} parent=0 // pred_region
    _
  $region13: #{_decoder_forward_jit.15} parent=0 // pred_fallthru
    _
  // Predicated region
  $region14: #{_decoder_forward_jit.15} parent=0 // pred_check
    _
  $region15: #{_decoder_forward_jit.15} parent=0 // pred_check_branch
    %17 = sbr.rel (0) target = $region17
  $region16: #{_decoder_forward_jit.15} parent=0 // pred_region
    _
  $region17: #{_decoder_forward_jit.15} parent=0 // pred_fallthru
    _
  // Predicated region
  $region18: #{_decoder_forward_jit.15} parent=0 // pred_check
    _
  $region19: #{_decoder_forward_jit.15} parent=0 // pred_check_branch
    %19 = sbr.rel (0) target = $region21
  $region20: #{_decoder_forward_jit.15} parent=0 // pred_region
    _
  $region21: #{_decoder_forward_jit.15} parent=0 // pred_fallthru
    _
  %v20 = vld [vmem:[%s0] sm:$0xff]
  %v21 = vld [vmem:[%s0 + $0x8] sm:$0xff]
  %v22 = vld [vmem:[%s1] sm:$0x1]
  %v23 = vld [vmem:[%s2] sm:$0x1]
  %vm24 = vcmask 261120
  %v25 = vsel %vm24, %v20, 0.0
  %26 = vadd.xlane.f32.xlu0 %v25
  %v27 = vpop.xlane.xlu0 %26
  %v28 = vsel %vm24, %v21, 0.0
  %29 = vadd.xlane.f32.xlu0 %v28
  %v30 = vpop.xlane.xlu0 %29
  %v31 = vrcp.pop 32.0
  %v32 = vmul.f32 32.0, %v31
  %v33 = vsub.f32 1.0, %v32
  %v34 = vmul.f32 %v31, %v33
  %v35 = vadd.f32 %v31, %v34
  %vm36 = vweird.f32 %v31
  %v37 = vsel %vm36, %v31, %v35
  %v38 = vmul.f32 %v27, %v37
  %v39 = vmul.f32 %v30, %v37
  %v40 = vsub.f32 %v20, %v38
  %v41 = vsub.f32 %v21, %v39
  %v42 = vmul.f32 %v40, %v40
  %v43 = vmul.f32 %v41, %v41
  %v44 = vsel %vm24, %v42, 0.0
  %45 = vadd.xlane.f32.xlu0 %v44
  %v46 = vpop.xlane.xlu0 %45
  %v47 = vsel %vm24, %v43, 0.0
  %48 = vadd.xlane.f32.xlu0 %v47
  %v49 = vpop.xlane.xlu0 %48
  %v50 = vmul.f32 %v46, 0.032258064
  %v51 = vmul.f32 %v49, 0.032258064
  %v52 = vrsqrt.pop %v50
  %v53 = vmul.f32 %v52, %v50
  %v54 = vmul.f32 %v53, %v52
  %v55 = vmul.f32 0.5, %v54
  %v56 = vsub.f32 1.5, %v55
  %v57 = vmul.f32 %v52, %v56
  %v58 = vmul.f32 %v50, %v57
  %vm59 = vcmp.eq.f32.partialorder %v50, inf
  %v60 = vsel %vm59, %v50, %v58
  %vm61 = vcmp.eq.f32.partialorder %v50, 0.0
  %v62 = vand.u32 %v50, 2147483648
  %v63 = vsel %vm61, %v62, %v60
  %v64 = vrsqrt.pop %v51
  %v65 = vmul.f32 %v64, %v51
  %v66 = vmul.f32 %v65, %v64
  %v67 = vmul.f32 0.5, %v66
  %v68 = vsub.f32 1.5, %v67
  %v69 = vmul.f32 %v64, %v68
  %v70 = vmul.f32 %v51, %v69
  %vm71 = vcmp.eq.f32.partialorder %v51, inf
  %v72 = vsel %vm71, %v51, %v70
  %vm73 = vcmp.eq.f32.partialorder %v51, 0.0
  %v74 = vand.u32 %v51, 2147483648
  %v75 = vsel %vm73, %v74, %v72
  %v76 = vadd.f32 %v63, 1e-06
  %v77 = vadd.f32 %v75, 1e-06
  %v78 = vrcp.pop %v76
  %v79 = vrcp.pop %v77
  %v81 = vperm.slane %v22, 0
  %v83 = vmul.f32 %v81, %v40
  %v84 = vmul.f32 %v81, %v41
  %v85 = vmul.f32 %v83, %v78
  %v86 = vmul.f32 %v84, %v79
  %v88 = vperm.slane %v23, 0
  %v90 = vadd.f32 %v85, %v88
  %v91 = vadd.f32 %v86, %v88
  %v92 = vld [vmem:[%s3] sm:$0xff]
  %v93 = vld [vmem:[%s3 + $0x8] sm:$0xff]
  %v94 = vld [vmem:[%s3 + $0x10] sm:$0xff]
  %v95 = vld [vmem:[%s3 + $0x18] sm:$0xff]
  %v96 = vld [vmem:[%s4] sm:$0x1]
  %v98 = vperm.slane %v96, 0
  %v101 = vsel %vm24, %v90, 0
  %v104 = vsel %vm24, %v91, 0
  %106 = vmatpush.msra.mxu0 0.0
  %107 = vmatpush.msra.mxu0 0.0
  %108 = vmatpush.msra.mxu0 0.0
  %109 = vmatpush.msra.mxu0 0.0
  %110 = vmatpush.msra.mxu0 0.0
  %111 = vmatpush.msra.mxu0 0.0
  %112 = vmatpush.msra.mxu0 0.0
  %113 = vmatpush.msra.mxu0 0.0
  %114 = vmatpush.msra.mxu0 0.0
  %115 = vmatpush.msra.mxu0 0.0
  %116 = vmatpush.msra.mxu0 0.0
  %117 = vmatpush.msra.mxu0 0.0
  %118 = vmatpush.msra.mxu0 %v95
  %119 = vmatpush.msra.mxu0 %v94
  %120 = vmatpush.msra.mxu0 %v93
  %121 = vmatpush.msra.mxu0 %v92
  %122 = vmatmul.f32.gmra.mxu0 %v101
  %v123 = vpop.f32.mrf.mxu0
  %v124 = vadd.f32 %v98, %v123
  %125 = vmatmul.f32.gmra.mxu0 %v104
  %v126 = vpop.f32.mrf.mxu0
  %v127 = vadd.f32 %v98, %v126
  %128 = vdwg.mxu0
  %129 = vst.msk [vmem:[%s5] sm:$0xff] %vm24, %v124
  %130 = vst.msk [vmem:[%s5 + $0x8] sm:$0xff] %vm24, %v127
  // Predicated region
  $region22: #{_decoder_forward_jit.15} parent=0 // pred_check
    _
  $region23: #{_decoder_forward_jit.15} parent=0 // pred_check_branch
    %132 = sbr.rel (0) target = $region25
  $region24: #{_decoder_forward_jit.15} parent=0 // pred_region
    _
  $region25: #{_decoder_forward_jit.15} parent=0 // pred_fallthru
    _
  // Predicated region
  $region26: #{_decoder_forward_jit.15} parent=0 // pred_check
    _
  $region27: #{_decoder_forward_jit.15} parent=0 // pred_check_branch
    %134 = sbr.rel (0) target = $region29
  $region28: #{_decoder_forward_jit.15} parent=0 // pred_region
    _
  $region29: #{_decoder_forward_jit.15} parent=0 // pred_fallthru
    _

// kernel: _decoder_forward_jit.14
$region0: #{_decoder_forward_jit.14}
  #allocation0 [shape = 'u32[]', space=smem, size = 0x4, offset = 0x4, fixed_abs, tag = 'smem constant byte address 0x4 - core index']
  #allocation1 [shape = 'u32[72,128]{1,0:T(1,128)}', space=vmem, size = 0x9000, scoped, tag = 'internal scratch']
  #allocation2 [shape = 'f32[8,32]{1,0:T(8,128)}', space=vmem, size = 0x1000, scoped, tag = 'scratch operand']
  %s0 = inlined_call_operand.vmem [shape: f32[2,4,8,8], index: 0, kind: input, shape index: {}]
  %s1 = inlined_call_operand.vmem [shape: f32[2,4,8,8], index: 1, kind: input, shape index: {}]
  %s2 = inlined_call_operand.vmem [shape: f32[2,4,8,8], index: 2, kind: input, shape index: {}]
  %s3 = inlined_call_operand.vmem [shape: s8[2,8,8], index: 3, kind: input, shape index: {}]
  %s4 = inlined_call_operand.vmem [shape: f32[4,8,32], index: 4, kind: input, shape index: {}]
  %s5 = inlined_call_operand.vmem [shape: f32[1,32], index: 5, kind: input, shape index: {}]
  %s6 = inlined_call_operand.vmem [shape: f32[2,8,32], index: 6, kind: input, shape index: {}]
  %s7 = inlined_call_operand.vmem [shape: f32[2,8,32], index: 7, kind: output, shape index: {}]
  %s8 = sld [smem:[#allocation0]]
  $region69: #{_decoder_forward_jit.14} parent=0
    _
  %s10 = ssub.s32 1, %s8
  %s11 = scalar_select 0, %s10, %s8
  loop: start=0, step=1, limit=10
  $region2: #{_decoder_forward_jit.14} parent=0 // loop_pre_header
    _
  $region3: #{_decoder_forward_jit.14} parent=0 // loop_header
    %s13 = sphi 0, %s17
    %p14 = scmp.ge.s32.totalorder %s13, 10
    %s20 = sphi 0, %s39
    %s21 = sphi 0, %s35
    %s22 = sphi 0, %s31
    %s23 = sphi 0, %s20
    %s24 = sphi 0, %s21
    %s25 = sphi 0, %s22
    %s26 = sphi 0, %s23
    %s27 = sphi 0, %s24
    %s28 = sphi 0, %s25
    %s46 = sphi 0, %s48
    %s49 = sphi 0, %s46
    %s50 = sphi 0, %s49
    %s66 = sphi 0, %s50
    %s74 = sphi 0, %s76
    %s77 = sphi 0, %s74
    %s78 = sphi 0, %s77
    %s94 = sphi 0, %s78
    %s102 = sphi 0, %s104
    %s105 = sphi 0, %s102
    %s106 = sphi 0, %s105
    %s122 = sphi 0, %s106
    %s130 = sphi 0, %s132
    %s133 = sphi 0, %s130
    %s134 = sphi 0, %s133
    %s150 = sphi 0, %s134
    %s156 = sphi 0, %s158
    %s159 = sphi 0, %s156
    %s160 = sphi 0, %s159
    %s176 = sphi 0, %s160
    %s180 = sphi 0, %s180
    %s182 = sphi 0, %s180
    %s183 = sphi 0, %s182
    %s197 = sphi 0, %s183
    %s205 = sphi 0, %s207
    %s208 = sphi 0, %s205
    %s209 = sphi 0, %s208
    %s225 = sphi 0, %s209
    %s233 = sphi 0, %s235
    %s236 = sphi 0, %s233
    %s237 = sphi 0, %s236
    %s253 = sphi 0, %s237
  $region4: #{_decoder_forward_jit.14} parent=0 // loop_header_branch
    %16 = sbr.rel (%p14) target = $region8
  $region5: #{_decoder_forward_jit.14} parent=0 // loop_body
    %s18 = ssub.s32 %s13, 1
    %s19 = ssub.s32 %s13, 2
    %s29 = sadd.s32 1, %s22
    %p30 = scmp.ge.s32.totalorder %s29, 4
    %s31 = scalar_select %p30, 0, %s29
    %s32 = sadd.s32 1, %s21
    %s33 = scalar_select %p30, %s32, %s21
    %p34 = scmp.ge.s32.totalorder %s33, 1
    %s35 = scalar_select %p34, 0, %s33
    %s36 = sadd.s32 1, %s20
    %s37 = scalar_select %p34, %s36, %s20
    %p38 = scmp.ge.s32.totalorder %s37, 2
    %s39 = scalar_select %p38, 0, %s37
    %s40 = ssub.s32 %s20, %s39
    %s41 = ssub.s32 %s22, %s31
    %s42 = sor.u32 %s40, %s41
    %s43 = ssub.s32 %s21, %s35
    %s44 = sor.u32 %s42, %s43
    %p45 = scmp.eq.s32.totalorder %s44, 0
    %s47 = sadd.s32 %s46, 1
    %s48 = scalar_select %p45, %s46, %s47
    %p51 = pneg %p45
    %p52 = scmp.eq.s32.totalorder %s13, 7
    %p53 = por %p51, %p52
    %p54 = scmp.ne.s32.totalorder %s46, %s49
    %p55 = scmp.eq.s32.totalorder %s13, 0
    %p56 = por %p54, %p55
    %p57 = scmp.ne.s32.totalorder %s46, %s49
    %p58 = scmp.eq.s32.totalorder %s18, 7
    %p59 = por %p57, %p58
    %p60 = scmp.ne.s32.totalorder %s49, %s50
    %p61 = scmp.eq.s32.totalorder %s18, 0
    %p62 = por %p60, %p61
    %p63 = scmp.ne.s32.totalorder %s49, %s50
    %p64 = scmp.eq.s32.totalorder %s19, 7
    %p65 = por %p63, %p64
    %p67 = scmp.ne.s32.totalorder %s50, %s66
    %p68 = scmp.eq.s32.totalorder %s19, 0
    %p69 = por %p67, %p68
    %s70 = ssub.s32 %s20, %s39
    %s71 = ssub.s32 %s22, %s31
    %s72 = sor.u32 %s70, %s71
    %p73 = scmp.eq.s32.totalorder %s72, 0
    %s75 = sadd.s32 %s74, 1
    %s76 = scalar_select %p73, %s74, %s75
    %p79 = pneg %p73
    %p80 = scmp.eq.s32.totalorder %s13, 7
    %p81 = por %p79, %p80
    %p82 = scmp.ne.s32.totalorder %s74, %s77
    %p83 = scmp.eq.s32.totalorder %s13, 0
    %p84 = por %p82, %p83
    %p85 = scmp.ne.s32.totalorder %s74, %s77
    %p86 = scmp.eq.s32.totalorder %s18, 7
    %p87 = por %p85, %p86
    %p88 = scmp.ne.s32.totalorder %s77, %s78
    %p89 = scmp.eq.s32.totalorder %s18, 0
    %p90 = por %p88, %p89
    %p91 = scmp.ne.s32.totalorder %s77, %s78
    %p92 = scmp.eq.s32.totalorder %s19, 7
    %p93 = por %p91, %p92
    %p95 = scmp.ne.s32.totalorder %s78, %s94
    %p96 = scmp.eq.s32.totalorder %s19, 0
    %p97 = por %p95, %p96
    %s98 = ssub.s32 %s20, %s39
    %s99 = ssub.s32 %s22, %s31
    %s100 = sor.u32 %s98, %s99
    %p101 = scmp.eq.s32.totalorder %s100, 0
    %s103 = sadd.s32 %s102, 1
    %s104 = scalar_select %p101, %s102, %s103
    %p107 = pneg %p101
    %p108 = scmp.eq.s32.totalorder %s13, 7
    %p109 = por %p107, %p108
    %p110 = scmp.ne.s32.totalorder %s102, %s105
    %p111 = scmp.eq.s32.totalorder %s13, 0
    %p112 = por %p110, %p111
    %p113 = scmp.ne.s32.totalorder %s102, %s105
    %p114 = scmp.eq.s32.totalorder %s18, 7
    %p115 = por %p113, %p114
    %p116 = scmp.ne.s32.totalorder %s105, %s106
    %p117 = scmp.eq.s32.totalorder %s18, 0
    %p118 = por %p116, %p117
    %p119 = scmp.ne.s32.totalorder %s105, %s106
    %p120 = scmp.eq.s32.totalorder %s19, 7
    %p121 = por %p119, %p120
    %p123 = scmp.ne.s32.totalorder %s106, %s122
    %p124 = scmp.eq.s32.totalorder %s19, 0
    %p125 = por %p123, %p124
    %s126 = ssub.s32 %s20, %s39
    %s127 = ssub.s32 %s21, %s35
    %s128 = sor.u32 %s126, %s127
    %p129 = scmp.eq.s32.totalorder %s128, 0
    %s131 = sadd.s32 %s130, 1
    %s132 = scalar_select %p129, %s130, %s131
    %p135 = pneg %p129
    %p136 = scmp.eq.s32.totalorder %s13, 7
    %p137 = por %p135, %p136
    %p138 = scmp.ne.s32.totalorder %s130, %s133
    %p139 = scmp.eq.s32.totalorder %s13, 0
    %p140 = por %p138, %p139
    %p141 = scmp.ne.s32.totalorder %s130, %s133
    %p142 = scmp.eq.s32.totalorder %s18, 7
    %p143 = por %p141, %p142
    %p144 = scmp.ne.s32.totalorder %s133, %s134
    %p145 = scmp.eq.s32.totalorder %s18, 0
    %p146 = por %p144, %p145
    %p147 = scmp.ne.s32.totalorder %s133, %s134
    %p148 = scmp.eq.s32.totalorder %s19, 7
    %p149 = por %p147, %p148
    %p151 = scmp.ne.s32.totalorder %s134, %s150
    %p152 = scmp.eq.s32.totalorder %s19, 0
    %p153 = por %p151, %p152
    %s154 = ssub.s32 %s22, %s31
    %p155 = scmp.eq.s32.totalorder %s154, 0
    %s157 = sadd.s32 %s156, 1
    %s158 = scalar_select %p155, %s156, %s157
    %p161 = pneg %p155
    %p162 = scmp.eq.s32.totalorder %s13, 7
    %p163 = por %p161, %p162
    %p164 = scmp.ne.s32.totalorder %s156, %s159
    %p165 = scmp.eq.s32.totalorder %s13, 0
    %p166 = por %p164, %p165
    %p167 = scmp.ne.s32.totalorder %s156, %s159
    %p168 = scmp.eq.s32.totalorder %s18, 7
    %p169 = por %p167, %p168
    %p170 = scmp.ne.s32.totalorder %s159, %s160
    %p171 = scmp.eq.s32.totalorder %s18, 0
    %p172 = por %p170, %p171
    %p173 = scmp.ne.s32.totalorder %s159, %s160
    %p174 = scmp.eq.s32.totalorder %s19, 7
    %p175 = por %p173, %p174
    %p177 = scmp.ne.s32.totalorder %s160, %s176
    %p178 = scmp.eq.s32.totalorder %s19, 0
    %p179 = por %p177, %p178
    %s181 = sadd.s32 %s180, 1
    %p184 = scmp.eq.s32.totalorder %s13, 7
    %p185 = scmp.ne.s32.totalorder %s180, %s182
    %p186 = scmp.eq.s32.totalorder %s13, 0
    %p187 = por %p185, %p186
    %p188 = scmp.ne.s32.totalorder %s180, %s182
    %p189 = scmp.eq.s32.totalorder %s18, 7
    %p190 = por %p188, %p189
    %p191 = scmp.ne.s32.totalorder %s182, %s183
    %p192 = scmp.eq.s32.totalorder %s18, 0
    %p193 = por %p191, %p192
    %p194 = scmp.ne.s32.totalorder %s182, %s183
    %p195 = scmp.eq.s32.totalorder %s19, 7
    %p196 = por %p194, %p195
    %p198 = scmp.ne.s32.totalorder %s183, %s197
    %p199 = scmp.eq.s32.totalorder %s19, 0
    %p200 = por %p198, %p199
    %s201 = ssub.s32 %s20, %s39
    %s202 = ssub.s32 %s21, %s35
    %s203 = sor.u32 %s201, %s202
    %p204 = scmp.eq.s32.totalorder %s203, 0
    %s206 = sadd.s32 %s205, 1
    %s207 = scalar_select %p204, %s205, %s206
    %p210 = pneg %p204
    %p211 = scmp.eq.s32.totalorder %s13, 7
    %p212 = por %p210, %p211
    %p213 = scmp.ne.s32.totalorder %s205, %s208
    %p214 = scmp.eq.s32.totalorder %s13, 0
    %p215 = por %p213, %p214
    %p216 = scmp.ne.s32.totalorder %s205, %s208
    %p217 = scmp.eq.s32.totalorder %s18, 7
    %p218 = por %p216, %p217
    %p219 = scmp.ne.s32.totalorder %s208, %s209
    %p220 = scmp.eq.s32.totalorder %s18, 0
    %p221 = por %p219, %p220
    %p222 = scmp.ne.s32.totalorder %s208, %s209
    %p223 = scmp.eq.s32.totalorder %s19, 7
    %p224 = por %p222, %p223
    %p226 = scmp.ne.s32.totalorder %s209, %s225
    %p227 = scmp.eq.s32.totalorder %s19, 0
    %p228 = por %p226, %p227
    %s229 = ssub.s32 %s20, %s39
    %s230 = ssub.s32 %s21, %s35
    %s231 = sor.u32 %s229, %s230
    %p232 = scmp.eq.s32.totalorder %s231, 0
    %s234 = sadd.s32 %s233, 1
    %s235 = scalar_select %p232, %s233, %s234
    %p238 = pneg %p232
    %p239 = scmp.eq.s32.totalorder %s13, 7
    %p240 = por %p238, %p239
    %p241 = scmp.ne.s32.totalorder %s233, %s236
    %p242 = scmp.eq.s32.totalorder %s13, 0
    %p243 = por %p241, %p242
    %p244 = scmp.ne.s32.totalorder %s233, %s236
    %p245 = scmp.eq.s32.totalorder %s18, 7
    %p246 = por %p244, %p245
    %p247 = scmp.ne.s32.totalorder %s236, %s237
    %p248 = scmp.eq.s32.totalorder %s18, 0
    %p249 = por %p247, %p248
    %p250 = scmp.ne.s32.totalorder %s236, %s237
    %p251 = scmp.eq.s32.totalorder %s19, 7
    %p252 = por %p250, %p251
    %p254 = scmp.ne.s32.totalorder %s237, %s253
    %p255 = scmp.eq.s32.totalorder %s19, 0
    %p256 = por %p254, %p255
    %p257 = scmp.le.s32.totalorder 1, %s13
    %p258 = scmp.lt.s32.totalorder %s13, 9
    %p259 = pnand %p257, %p258
    %p260 = pneg %p259
    // Predicated region
    $region9: #{_decoder_forward_jit.14} parent=5 // pred_check
      _
    $region10: #{_decoder_forward_jit.14} parent=5 // pred_check_branch
      %262 = sbr.rel (%p259) target = $region12
    $region11: #{_decoder_forward_jit.14} parent=5 // pred_region
      %s263 = ssub.s32 %s13, 1
      // Predicated region
      $region13: #{_decoder_forward_jit.14} parent=11 // pred_check
        %p264 = pneg %p193
      $region14: #{_decoder_forward_jit.14} parent=11 // pred_check_branch
        %266 = sbr.rel (%p264) target = $region16
      $region15: #{_decoder_forward_jit.14} parent=11 // pred_region
        _
      $region16: #{_decoder_forward_jit.14} parent=11 // pred_fallthru
        _
    $region12: #{_decoder_forward_jit.14} parent=5 // pred_fallthru
      _
    %p267 = scmp.lt.s32.totalorder %s13, 8
    // Predicated region
    $region17: #{_decoder_forward_jit.14} parent=5 // pred_check
      %p268 = pneg %p267
    $region18: #{_decoder_forward_jit.14} parent=5 // pred_check_branch
      %270 = sbr.rel (%p268) target = $region20
    $region19: #{_decoder_forward_jit.14} parent=5 // pred_region
      // Predicated region
      $region21: #{_decoder_forward_jit.14} parent=19 // pred_check
        %p271 = pneg %p56
      $region22: #{_decoder_forward_jit.14} parent=19 // pred_check_branch
        %273 = sbr.rel (%p271) target = $region24
      $region23: #{_decoder_forward_jit.14} parent=19 // pred_region
        %p274 = scmp.lt.s32.totalorder %s20, 1
        %s275 = scalar_select %p274, %s20, 1
        %p276 = scmp.lt.s32.totalorder %s22, 3
        %s277 = scalar_select %p276, %s22, 3
        %p278 = scmp.lt.s32.totalorder %s21, 0
        %s279 = scalar_select %p278, %s21, 0
        %s280 = sadd.s32 %s279, %s277
        %s281 = smul.addr %s275, 4
        %s282 = sadd.s32 %s280, %s281
        %s283 = smul.addr %s282, 8
        %s284 = scalar_lea.vmem %s0, %s283
      $region24: #{_decoder_forward_jit.14} parent=19 // pred_fallthru
        _
      // Predicated region
      $region25: #{_decoder_forward_jit.14} parent=19 // pred_check
        %p285 = pneg %p84
      $region26: #{_decoder_forward_jit.14} parent=19 // pred_check_branch
        %287 = sbr.rel (%p285) target = $region28
      $region27: #{_decoder_forward_jit.14} parent=19 // pred_region
        %p288 = scmp.lt.s32.totalorder %s20, 1
        %s289 = scalar_select %p288, %s20, 1
        %p290 = scmp.lt.s32.totalorder %s22, 3
        %s291 = scalar_select %p290, %s22, 3
        %s292 = smul.addr %s289, 4
        %s293 = sadd.s32 %s291, %s292
        %s294 = smul.addr %s293, 8
        %s295 = scalar_lea.vmem %s1, %s294
      $region28: #{_decoder_forward_jit.14} parent=19 // pred_fallthru
        _
      // Predicated region
      $region29: #{_decoder_forward_jit.14} parent=19 // pred_check
        %p296 = pneg %p112
      $region30: #{_decoder_forward_jit.14} parent=19 // pred_check_branch
        %298 = sbr.rel (%p296) target = $region32
      $region31: #{_decoder_forward_jit.14} parent=19 // pred_region
        %p299 = scmp.lt.s32.totalorder %s20, 1
        %s300 = scalar_select %p299, %s20, 1
        %p301 = scmp.lt.s32.totalorder %s22, 3
        %s302 = scalar_select %p301, %s22, 3
        %s303 = smul.addr %s300, 4
        %s304 = sadd.s32 %s302, %s303
        %s305 = smul.addr %s304, 8
        %s306 = scalar_lea.vmem %s2, %s305
      $region32: #{_decoder_forward_jit.14} parent=19 // pred_fallthru
        _
      // Predicated region
      $region33: #{_decoder_forward_jit.14} parent=19 // pred_check
        %p307 = pneg %p140
      $region34: #{_decoder_forward_jit.14} parent=19 // pred_check_branch
        %309 = sbr.rel (%p307) target = $region36
      $region35: #{_decoder_forward_jit.14} parent=19 // pred_region
        %p310 = scmp.lt.s32.totalorder %s20, 1
        %s311 = scalar_select %p310, %s20, 1
        %p312 = scmp.lt.s32.totalorder %s21, 0
        %s313 = scalar_select %p312, %s21, 0
        %s314 = sadd.s32 %s313, %s311
        %s315 = smul.addr %s314, 2
        %s316 = scalar_lea.vmem %s3, %s315
      $region36: #{_decoder_forward_jit.14} parent=19 // pred_fallthru
        _
      // Predicated region
      $region37: #{_decoder_forward_jit.14} parent=19 // pred_check
        %p317 = pneg %p166
      $region38: #{_decoder_forward_jit.14} parent=19 // pred_check_branch
        %319 = sbr.rel (%p317) target = $region40
      $region39: #{_decoder_forward_jit.14} parent=19 // pred_region
        %p320 = scmp.lt.s32.totalorder %s22, 3
        %s321 = scalar_select %p320, %s22, 3
        %s322 = smul.addr %s321, 8
        %s323 = scalar_lea.vmem %s4, %s322
      $region40: #{_decoder_forward_jit.14} parent=19 // pred_fallthru
        _
      // Predicated region
      $region41: #{_decoder_forward_jit.14} parent=19 // pred_check
        %p324 = pneg %p215
      $region42: #{_decoder_forward_jit.14} parent=19 // pred_check_branch
        %326 = sbr.rel (%p324) target = $region44
      $region43: #{_decoder_forward_jit.14} parent=19 // pred_region
        %p327 = scmp.lt.s32.totalorder %s20, 1
        %s328 = scalar_select %p327, %s20, 1
        %p329 = scmp.lt.s32.totalorder %s21, 0
        %s330 = scalar_select %p329, %s21, 0
        %s331 = sadd.s32 %s330, %s328
        %s332 = smul.addr %s331, 8
        %s333 = scalar_lea.vmem %s6, %s332
      $region44: #{_decoder_forward_jit.14} parent=19 // pred_fallthru
        _
    $region20: #{_decoder_forward_jit.14} parent=5 // pred_fallthru
      _
    %p334 = scmp.le.s32.totalorder 1, %s13
    %p335 = scmp.lt.s32.totalorder %s13, 9
    %p336 = pnand %p334, %p335
    %p337 = pneg %p336
    // Predicated region
    $region45: #{_decoder_forward_jit.14} parent=5 // pred_check
      _
    $region46: #{_decoder_forward_jit.14} parent=5 // pred_check_branch
      %339 = sbr.rel (%p336) target = $region48
    $region47: #{_decoder_forward_jit.14} parent=5 // pred_region
      %s340 = ssub.s32 %s13, 1
      %p341 = scmp.lt.s32.totalorder %s23, 1
      %s342 = scalar_select %p341, %s23, 1
      %p343 = scmp.lt.s32.totalorder %s25, 3
      %s344 = scalar_select %p343, %s25, 3
      %p345 = scmp.lt.s32.totalorder %s24, 0
      %s346 = scalar_select %p345, %s24, 0
      %s347 = sadd.s32 %s346, %s344
      %s348 = smul.addr %s342, 4
      %s349 = sadd.s32 %s347, %s348
      %s350 = smul.addr %s349, 8
      %s351 = scalar_lea.vmem %s0, %s350
      %p352 = pneg %p62
      %p353 = pneg %p59
      %p354 = scmp.lt.s32.totalorder %s23, 1
      %s355 = scalar_select %p354, %s23, 1
      %p356 = scmp.lt.s32.totalorder %s25, 3
      %s357 = scalar_select %p356, %s25, 3
      %s358 = smul.addr %s355, 4
      %s359 = sadd.s32 %s357, %s358
      %s360 = smul.addr %s359, 8
      %s361 = scalar_lea.vmem %s1, %s360
      %p362 = pneg %p90
      %p363 = pneg %p87
      %p364 = scmp.lt.s32.totalorder %s23, 1
      %s365 = scalar_select %p364, %s23, 1
      %p366 = scmp.lt.s32.totalorder %s25, 3
      %s367 = scalar_select %p366, %s25, 3
      %s368 = smul.addr %s365, 4
      %s369 = sadd.s32 %s367, %s368
      %s370 = smul.addr %s369, 8
      %s371 = scalar_lea.vmem %s2, %s370
      %p372 = pneg %p118
      %p373 = pneg %p115
      %p374 = scmp.lt.s32.totalorder %s23, 1
      %s375 = scalar_select %p374, %s23, 1
      %p376 = scmp.lt.s32.totalorder %s24, 0
      %s377 = scalar_select %p376, %s24, 0
      %s378 = sadd.s32 %s377, %s375
      %s379 = smul.addr %s378, 2
      %s380 = scalar_lea.vmem %s3, %s379
      %p381 = pneg %p146
      %p382 = pneg %p143
      %p383 = scmp.lt.s32.totalorder %s25, 3
      %s384 = scalar_select %p383, %s25, 3
      %s385 = smul.addr %s384, 8
      %s386 = scalar_lea.vmem %s4, %s385
      %p387 = pneg %p172
      %p388 = pneg %p169
      %p389 = pneg %p193
      %p390 = pneg %p190
      %p391 = scmp.lt.s32.totalorder %s23, 1
      %s392 = scalar_select %p391, %s23, 1
      %p393 = scmp.lt.s32.totalorder %s24, 0
      %s394 = scalar_select %p393, %s24, 0
      %s395 = sadd.s32 %s394, %s392
      %s396 = smul.addr %s395, 8
      %s397 = scalar_lea.vmem %s6, %s396
      %p398 = pneg %p221
      %p399 = pneg %p218
      %p400 = pneg %p249
      %p401 = pneg %p246
      %p402 = scmp.lt.s32.totalorder %s23, 1
      %s403 = scalar_select %p402, %s23, 1
      %p404 = scmp.lt.s32.totalorder %s24, 0
      %s405 = scalar_select %p404, %s24, 0
      %s406 = sadd.s32 %s405, %s403
      %s407 = smul.addr %s406, 8
      %s408 = scalar_lea.vmem %s7, %s407
      %p409 = scmp.lt.s32.totalorder %s23, 1
      %s410 = scalar_select %p409, %s23, 1
      %p411 = scmp.lt.s32.totalorder %s25, 3
      %s412 = scalar_select %p411, %s25, 3
      %p413 = scmp.lt.s32.totalorder %s24, 0
      %s414 = scalar_select %p413, %s24, 0
      %s415 = sadd.s32 %s414, %s412
      %s416 = smul.addr %s410, 4
      %s417 = sadd.s32 %s415, %s416
      %s418 = smul.addr %s417, 8
      %s419 = scalar_lea.vmem %s0, %s418
      %p420 = scmp.lt.s32.totalorder %s23, 1
      %s421 = scalar_select %p420, %s23, 1
      %p422 = scmp.lt.s32.totalorder %s25, 3
      %s423 = scalar_select %p422, %s25, 3
      %s424 = smul.addr %s421, 4
      %s425 = sadd.s32 %s423, %s424
      %s426 = smul.addr %s425, 8
      %s427 = scalar_lea.vmem %s1, %s426
      %p428 = scmp.lt.s32.totalorder %s23, 1
      %s429 = scalar_select %p428, %s23, 1
      %p430 = scmp.lt.s32.totalorder %s25, 3
      %s431 = scalar_select %p430, %s25, 3
      %s432 = smul.addr %s429, 4
      %s433 = sadd.s32 %s431, %s432
      %s434 = smul.addr %s433, 8
      %s435 = scalar_lea.vmem %s2, %s434
      %p436 = scmp.lt.s32.totalorder %s23, 1
      %s437 = scalar_select %p436, %s23, 1
      %p438 = scmp.lt.s32.totalorder %s24, 0
      %s439 = scalar_select %p438, %s24, 0
      %s440 = sadd.s32 %s439, %s437
      %s441 = smul.addr %s440, 2
      %s442 = scalar_lea.vmem %s3, %s441
      %p443 = scmp.lt.s32.totalorder %s25, 3
      %s444 = scalar_select %p443, %s25, 3
      %s445 = smul.addr %s444, 8
      %s446 = scalar_lea.vmem %s4, %s445
      %p447 = scmp.lt.s32.totalorder %s23, 1
      %s448 = scalar_select %p447, %s23, 1
      %p449 = scmp.lt.s32.totalorder %s24, 0
      %s450 = scalar_select %p449, %s24, 0
      %s451 = sadd.s32 %s450, %s448
      %s452 = smul.addr %s451, 8
      %s453 = scalar_lea.vmem %s6, %s452
      %p454 = scmp.lt.s32.totalorder %s23, 1
      %s455 = scalar_select %p454, %s23, 1
      %p456 = scmp.lt.s32.totalorder %s24, 0
      %s457 = scalar_select %p456, %s24, 0
      %s458 = sadd.s32 %s457, %s455
      %s459 = smul.addr %s458, 8
      %s460 = scalar_lea.vmem %s7, %s459
      %v463 = vld [vmem:[%s419] sm:$0xff]
      %v464 = vld [vmem:[%s427] sm:$0xff]
      %v465 = vld [vmem:[%s435] sm:$0xff]
      %vm466 = vcmask 64512
      %v468 = vsel %vm466, %v463, 0
      %v471 = vsel %vm466, %v464, 0
      %473 = vmatpush.xpose.msra.mxu0 0.0
      %474 = vmatpush.xpose.msra.mxu0 0.0
      %475 = vmatpush.xpose.msra.mxu0 0.0
      %476 = vmatpush.xpose.msra.mxu0 0.0
      %477 = vmatpush.xpose.msra.mxu0 0.0
      %478 = vmatpush.xpose.msra.mxu0 0.0
      %479 = vmatpush.xpose.msra.mxu0 0.0
      %480 = vmatpush.xpose.msra.mxu0 0.0
      %481 = vmatpush.xpose.msra.mxu0 0.0
      %482 = vmatpush.xpose.msra.mxu0 0.0
      %483 = vmatpush.xpose.msra.mxu0 0.0
      %484 = vmatpush.xpose.msra.mxu0 0.0
      %485 = vmatpush.xpose.msra.mxu0 0.0
      %486 = vmatpush.xpose.msra.mxu0 0.0
      %487 = vmatpush.xpose.msra.mxu0 0.0
      %488 = vmatpush.xpose.msra.mxu0 %v471
      %489 = vmatmul.f32.gmra.mxu0 %v468
      %v490 = vpop.f32.mrf.mxu0
      %v491 = vadd.f32 0.0, %v490
      %492 = vdwg.mxu0
      %v493 = vmul.f32 %v491, 0.35355338
      %v494 = vld [vmem:[%s442] sm:$0x3]
      %vm495 = vnez %v494
      %v496 = vsel %vm495, 16843009, 0
      %v497 = vunpack.c.0.s8 %v496
      %vm498 = vcmp.ne.s32.totalorder %v497, 0
      %v499 = vsel %vm498, %v493, -1e+09
      %v500 = vsel %vm466, %v499, -inf
      %501 = vmax.xlane.f32.xlu0 %v500
      %v502 = vpop.xlane.xlu0 %501
      %v503 = vsub.f32 %v499, %v502
      %v504 = vmul.f32 %v503, 1.442695
      %v505 = vpow.pop %v504
      %v506 = vsel %vm466, %v505, 0.0
      %507 = vadd.xlane.f32.xlu0 %v506
      %v508 = vpop.xlane.xlu0 %507
      %v510 = vsel %vm466, %v505, 0
      %512 = vmatpush.msra.mxu0 0.0
      %513 = vmatpush.msra.mxu0 0.0
      %514 = vmatpush.msra.mxu0 0.0
      %515 = vmatpush.msra.mxu0 0.0
      %516 = vmatpush.msra.mxu0 0.0
      %517 = vmatpush.msra.mxu0 0.0
      %518 = vmatpush.msra.mxu0 0.0
      %519 = vmatpush.msra.mxu0 0.0
      %520 = vmatpush.msra.mxu0 0.0
      %521 = vmatpush.msra.mxu0 0.0
      %522 = vmatpush.msra.mxu0 0.0
      %523 = vmatpush.msra.mxu0 0.0
      %524 = vmatpush.msra.mxu0 0.0
      %525 = vmatpush.msra.mxu0 0.0
      %526 = vmatpush.msra.mxu0 0.0
      %527 = vmatpush.msra.mxu0 %v465
      %528 = vmatmul.f32.gmra.mxu0 %v510
      %v529 = vpop.f32.mrf.mxu0
      %v530 = vadd.f32 0.0, %v529
      %531 = vdwg.mxu0
      %v532 = vrcp.pop %v508
      %v533 = vmul.f32 %v530, %v532
      %v534 = vld [vmem:[%s446] sm:$0xff]
      %v536 = vsel %vm466, %v533, 0
      %538 = vmatpush.msra.mxu0 0.0
      %539 = vmatpush.msra.mxu0 0.0
      %540 = vmatpush.msra.mxu0 0.0
      %541 = vmatpush.msra.mxu0 0.0
      %542 = vmatpush.msra.mxu0 0.0
      %543 = vmatpush.msra.mxu0 0.0
      %544 = vmatpush.msra.mxu0 0.0
      %545 = vmatpush.msra.mxu0 0.0
      %546 = vmatpush.msra.mxu0 0.0
      %547 = vmatpush.msra.mxu0 0.0
      %548 = vmatpush.msra.mxu0 0.0
      %549 = vmatpush.msra.mxu0 0.0
      %550 = vmatpush.msra.mxu0 0.0
      %551 = vmatpush.msra.mxu0 0.0
      %552 = vmatpush.msra.mxu0 0.0
      %553 = vmatpush.msra.mxu0 %v534
      %554 = vmatmul.f32.gmra.mxu0 %v536
      %v555 = vpop.f32.mrf.mxu0
      %v556 = vadd.f32 0.0, %v555
      %557 = vdwg.mxu0
      %p558 = scmp.eq.s32.totalorder %s25, 0
      // Predicated region
      $region49: #{_decoder_forward_jit.14} parent=47 // pred_check
        %p559 = pneg %p558
      $region50: #{_decoder_forward_jit.14} parent=47 // pred_check_branch
        %561 = sbr.rel (%p559) target = $region52
      $region51: #{_decoder_forward_jit.14} parent=47 // pred_region
        %v562 = vld [vmem:[%s453] sm:$0xff]
        %v563 = vld [vmem:[%s5] sm:$0x1]
        %v565 = vperm.slane %v563, 0
        %v567 = vadd.f32 %v562, %v565
        %vm568 = vcmask 261120
        %569 = vst.msk [vmem:[#allocation2] sm:$0xff] %vm568, %v567
      $region52: #{_decoder_forward_jit.14} parent=47 // pred_fallthru
        _
      %v570 = vld [vmem:[#allocation2] sm:$0xff]
      %v571 = vadd.f32 %v570, %v556
      %vm572 = vcmask 261120
      %573 = vst.msk [vmem:[#allocation2] sm:$0xff] %vm572, %v571
      %p574 = scmp.eq.s32.totalorder %s25, 3
      // Predicated region
      $region53: #{_decoder_forward_jit.14} parent=47 // pred_check
        %p575 = pneg %p574
      $region54: #{_decoder_forward_jit.14} parent=47 // pred_check_branch
        %577 = sbr.rel (%p575) target = $region56
      $region55: #{_decoder_forward_jit.14} parent=47 // pred_region
        %v578 = vld [vmem:[#allocation2] sm:$0xff]
        %579 = vst.msk [vmem:[%s460] sm:$0xff] %vm572, %v578
      $region56: #{_decoder_forward_jit.14} parent=47 // pred_fallthru
        _
      %p580 = scmp.lt.s32.totalorder %s23, 1
      %s581 = scalar_select %p580, %s23, 1
      %p582 = scmp.lt.s32.totalorder %s24, 0
      %s583 = scalar_select %p582, %s24, 0
      %s584 = sadd.s32 %s583, %s581
      %s585 = smul.addr %s584, 8
      %s586 = scalar_lea.vmem %s7, %s585
      // Predicated region
      $region57: #{_decoder_forward_jit.14} parent=47 // pred_check
        %p587 = pneg %p246
      $region58: #{_decoder_forward_jit.14} parent=47 // pred_check_branch
        %589 = sbr.rel (%p587) target = $region60
      $region59: #{_decoder_forward_jit.14} parent=47 // pred_region
        _
      $region60: #{_decoder_forward_jit.14} parent=47 // pred_fallthru
        _
    $region48: #{_decoder_forward_jit.14} parent=5 // pred_fallthru
      _
    %p590 = scmp.le.s32.totalorder 2, %s13
    // Predicated region
    $region61: #{_decoder_forward_jit.14} parent=5 // pred_check
      %p591 = pneg %p590
    $region62: #{_decoder_forward_jit.14} parent=5 // pred_check_branch
      %593 = sbr.rel (%p591) target = $region64
    $region63: #{_decoder_forward_jit.14} parent=5 // pred_region
      %s594 = ssub.s32 %s13, 2
      // Predicated region
      $region65: #{_decoder_forward_jit.14} parent=63 // pred_check
        %p595 = pneg %p252
      $region66: #{_decoder_forward_jit.14} parent=63 // pred_check_branch
        %597 = sbr.rel (%p595) target = $region68
      $region67: #{_decoder_forward_jit.14} parent=63 // pred_region
        %p598 = scmp.lt.s32.totalorder %s26, 1
        %s599 = scalar_select %p598, %s26, 1
        %p600 = scmp.lt.s32.totalorder %s27, 0
        %s601 = scalar_select %p600, %s27, 0
        %s602 = sadd.s32 %s601, %s599
        %s603 = smul.addr %s602, 8
        %s604 = scalar_lea.vmem %s7, %s603
      $region68: #{_decoder_forward_jit.14} parent=63 // pred_fallthru
        _
    $region64: #{_decoder_forward_jit.14} parent=5 // pred_fallthru
      _
  $region6: #{_decoder_forward_jit.14} parent=0 // loop_footer
    %s17 = sadd.s32 1, %s13
  $region7: #{_decoder_forward_jit.14} parent=0 // loop_footer_branch
    %12 = sbr.rel target = $region3
  $region8: #{_decoder_forward_jit.14} parent=0 // loop_exit
    _

// kernel: _decoder_forward_jit.19
$region0: #{_decoder_forward_jit.19}
  #allocation0 [shape = 'u32[]', space=smem, size = 0x4, offset = 0x4, fixed_abs, tag = 'smem constant byte address 0x4 - core index']
  #allocation1 [shape = 'u32[72,128]{1,0:T(1,128)}', space=vmem, size = 0x9000, scoped, tag = 'internal scratch']
  %s0 = inlined_call_operand.vmem [shape: f32[16,32], index: 0, kind: input, shape index: {}]
  %s1 = inlined_call_operand.vmem [shape: f32[1,32], index: 1, kind: input, shape index: {}]
  %s2 = inlined_call_operand.vmem [shape: f32[1,32], index: 2, kind: input, shape index: {}]
  %s3 = inlined_call_operand.vmem [shape: f32[32,96], index: 3, kind: input, shape index: {}]
  %s4 = inlined_call_operand.vmem [shape: f32[1,96], index: 4, kind: input, shape index: {}]
  %s5 = inlined_call_operand.vmem [shape: f32[16,96], index: 5, kind: output, shape index: {}]
  %s6 = sld [smem:[#allocation0]]
  $region30: #{_decoder_forward_jit.19} parent=0
    _
  %s8 = ssub.s32 1, %s6
  %s9 = scalar_select 0, %s8, %s6
  // Predicated region
  $region2: #{_decoder_forward_jit.19} parent=0 // pred_check
    _
  $region3: #{_decoder_forward_jit.19} parent=0 // pred_check_branch
    %11 = sbr.rel (0) target = $region5
  $region4: #{_decoder_forward_jit.19} parent=0 // pred_region
    _
  $region5: #{_decoder_forward_jit.19} parent=0 // pred_fallthru
    _
  // Predicated region
  $region6: #{_decoder_forward_jit.19} parent=0 // pred_check
    _
  $region7: #{_decoder_forward_jit.19} parent=0 // pred_check_branch
    %13 = sbr.rel (0) target = $region9
  $region8: #{_decoder_forward_jit.19} parent=0 // pred_region
    _
  $region9: #{_decoder_forward_jit.19} parent=0 // pred_fallthru
    _
  // Predicated region
  $region10: #{_decoder_forward_jit.19} parent=0 // pred_check
    _
  $region11: #{_decoder_forward_jit.19} parent=0 // pred_check_branch
    %15 = sbr.rel (0) target = $region13
  $region12: #{_decoder_forward_jit.19} parent=0 // pred_region
    _
  $region13: #{_decoder_forward_jit.19} parent=0 // pred_fallthru
    _
  // Predicated region
  $region14: #{_decoder_forward_jit.19} parent=0 // pred_check
    _
  $region15: #{_decoder_forward_jit.19} parent=0 // pred_check_branch
    %17 = sbr.rel (0) target = $region17
  $region16: #{_decoder_forward_jit.19} parent=0 // pred_region
    _
  $region17: #{_decoder_forward_jit.19} parent=0 // pred_fallthru
    _
  // Predicated region
  $region18: #{_decoder_forward_jit.19} parent=0 // pred_check
    _
  $region19: #{_decoder_forward_jit.19} parent=0 // pred_check_branch
    %19 = sbr.rel (0) target = $region21
  $region20: #{_decoder_forward_jit.19} parent=0 // pred_region
    _
  $region21: #{_decoder_forward_jit.19} parent=0 // pred_fallthru
    _
  %v20 = vld [vmem:[%s0] sm:$0xff]
  %v21 = vld [vmem:[%s0 + $0x8] sm:$0xff]
  %v22 = vld [vmem:[%s1] sm:$0x1]
  %v23 = vld [vmem:[%s2] sm:$0x1]
  %vm24 = vcmask 261120
  %v25 = vsel %vm24, %v20, 0.0
  %26 = vadd.xlane.f32.xlu0 %v25
  %v27 = vpop.xlane.xlu0 %26
  %v28 = vsel %vm24, %v21, 0.0
  %29 = vadd.xlane.f32.xlu0 %v28
  %v30 = vpop.xlane.xlu0 %29
  %v31 = vrcp.pop 32.0
  %v32 = vmul.f32 32.0, %v31
  %v33 = vsub.f32 1.0, %v32
  %v34 = vmul.f32 %v31, %v33
  %v35 = vadd.f32 %v31, %v34
  %vm36 = vweird.f32 %v31
  %v37 = vsel %vm36, %v31, %v35
  %v38 = vmul.f32 %v27, %v37
  %v39 = vmul.f32 %v30, %v37
  %v40 = vsub.f32 %v20, %v38
  %v41 = vsub.f32 %v21, %v39
  %v42 = vmul.f32 %v40, %v40
  %v43 = vmul.f32 %v41, %v41
  %v44 = vsel %vm24, %v42, 0.0
  %45 = vadd.xlane.f32.xlu0 %v44
  %v46 = vpop.xlane.xlu0 %45
  %v47 = vsel %vm24, %v43, 0.0
  %48 = vadd.xlane.f32.xlu0 %v47
  %v49 = vpop.xlane.xlu0 %48
  %v50 = vmul.f32 %v46, 0.032258064
  %v51 = vmul.f32 %v49, 0.032258064
  %v52 = vrsqrt.pop %v50
  %v53 = vmul.f32 %v52, %v50
  %v54 = vmul.f32 %v53, %v52
  %v55 = vmul.f32 0.5, %v54
  %v56 = vsub.f32 1.5, %v55
  %v57 = vmul.f32 %v52, %v56
  %v58 = vmul.f32 %v50, %v57
  %vm59 = vcmp.eq.f32.partialorder %v50, inf
  %v60 = vsel %vm59, %v50, %v58
  %vm61 = vcmp.eq.f32.partialorder %v50, 0.0
  %v62 = vand.u32 %v50, 2147483648
  %v63 = vsel %vm61, %v62, %v60
  %v64 = vrsqrt.pop %v51
  %v65 = vmul.f32 %v64, %v51
  %v66 = vmul.f32 %v65, %v64
  %v67 = vmul.f32 0.5, %v66
  %v68 = vsub.f32 1.5, %v67
  %v69 = vmul.f32 %v64, %v68
  %v70 = vmul.f32 %v51, %v69
  %vm71 = vcmp.eq.f32.partialorder %v51, inf
  %v72 = vsel %vm71, %v51, %v70
  %vm73 = vcmp.eq.f32.partialorder %v51, 0.0
  %v74 = vand.u32 %v51, 2147483648
  %v75 = vsel %vm73, %v74, %v72
  %v76 = vadd.f32 %v63, 1e-06
  %v77 = vadd.f32 %v75, 1e-06
  %v78 = vrcp.pop %v76
  %v79 = vrcp.pop %v77
  %v81 = vperm.slane %v22, 0
  %v83 = vmul.f32 %v81, %v40
  %v84 = vmul.f32 %v81, %v41
  %v85 = vmul.f32 %v83, %v78
  %v86 = vmul.f32 %v84, %v79
  %v88 = vperm.slane %v23, 0
  %v90 = vadd.f32 %v85, %v88
  %v91 = vadd.f32 %v86, %v88
  %v92 = vld [vmem:[%s3] sm:$0xff]
  %v93 = vld [vmem:[%s3 + $0x8] sm:$0xff]
  %v94 = vld [vmem:[%s3 + $0x10] sm:$0xff]
  %v95 = vld [vmem:[%s3 + $0x18] sm:$0xff]
  %v96 = vld [vmem:[%s4] sm:$0x1]
  %v98 = vperm.slane %v96, 0
  %v101 = vsel %vm24, %v90, 0
  %v104 = vsel %vm24, %v91, 0
  %106 = vmatpush.msra.mxu0 0.0
  %107 = vmatpush.msra.mxu0 0.0
  %108 = vmatpush.msra.mxu0 0.0
  %109 = vmatpush.msra.mxu0 0.0
  %110 = vmatpush.msra.mxu0 0.0
  %111 = vmatpush.msra.mxu0 0.0
  %112 = vmatpush.msra.mxu0 0.0
  %113 = vmatpush.msra.mxu0 0.0
  %114 = vmatpush.msra.mxu0 0.0
  %115 = vmatpush.msra.mxu0 0.0
  %116 = vmatpush.msra.mxu0 0.0
  %117 = vmatpush.msra.mxu0 0.0
  %118 = vmatpush.msra.mxu0 %v95
  %119 = vmatpush.msra.mxu0 %v94
  %120 = vmatpush.msra.mxu0 %v93
  %121 = vmatpush.msra.mxu0 %v92
  %122 = vmatmul.f32.gmra.mxu0 %v101
  %v123 = vpop.f32.mrf.mxu0
  %v124 = vadd.f32 %v98, %v123
  %125 = vmatmul.f32.gmra.mxu0 %v104
  %v126 = vpop.f32.mrf.mxu0
  %v127 = vadd.f32 %v98, %v126
  %128 = vdwg.mxu0
  %vm129 = vcmask 785408
  %130 = vst.msk [vmem:[%s5] sm:$0xff] %vm129, %v124
  %131 = vst.msk [vmem:[%s5 + $0x8] sm:$0xff] %vm129, %v127
  // Predicated region
  $region22: #{_decoder_forward_jit.19} parent=0 // pred_check
    _
  $region23: #{_decoder_forward_jit.19} parent=0 // pred_check_branch
    %133 = sbr.rel (0) target = $region25
  $region24: #{_decoder_forward_jit.19} parent=0 // pred_region
    _
  $region25: #{_decoder_forward_jit.19} parent=0 // pred_fallthru
    _
  // Predicated region
  $region26: #{_decoder_forward_jit.19} parent=0 // pred_check
    _
  $region27: #{_decoder_forward_jit.19} parent=0 // pred_check_branch
    %135 = sbr.rel (0) target = $region29
  $region28: #{_decoder_forward_jit.19} parent=0 // pred_region
    _
  $region29: #{_decoder_forward_jit.19} parent=0 // pred_fallthru
    _

// kernel: _decoder_forward_jit.18
$region0: #{_decoder_forward_jit.18}
  #allocation0 [shape = 'u32[]', space=smem, size = 0x4, offset = 0x4, fixed_abs, tag = 'smem constant byte address 0x4 - core index']
  #allocation1 [shape = 'u32[72,128]{1,0:T(1,128)}', space=vmem, size = 0x9000, scoped, tag = 'internal scratch']
  #allocation2 [shape = 'f32[16,32]{1,0:T(8,128)}', space=vmem, size = 0x2000, scoped, tag = 'scratch operand']
  #allocation3 [shape = 'f32[16,32]{1,0:T(8,128)}', space=vmem, size = 0x2000, scoped, tag = 'scratch operand']
  %s0 = inlined_call_operand.vmem [shape: f32[16,32], index: 0, kind: input, shape index: {}]
  %s1 = inlined_call_operand.vmem [shape: f32[1,32], index: 1, kind: input, shape index: {}]
  %s2 = inlined_call_operand.vmem [shape: f32[1,32], index: 2, kind: input, shape index: {}]
  %s3 = inlined_call_operand.vmem [shape: f32[32,64], index: 3, kind: input, shape index: {}]
  %s4 = inlined_call_operand.vmem [shape: f32[1,64], index: 4, kind: input, shape index: {}]
  %s5 = inlined_call_operand.vmem [shape: f32[64,32], index: 5, kind: input, shape index: {}]
  %s6 = inlined_call_operand.vmem [shape: f32[1,32], index: 6, kind: input, shape index: {}]
  %s7 = inlined_call_operand.vmem [shape: f32[16,32], index: 7, kind: output, shape index: {}]
  %s8 = sld [smem:[#allocation0]]
  $region46: #{_decoder_forward_jit.18} parent=0
    _
  %s10 = ssub.s32 1, %s8
  %s11 = scalar_select 0, %s10, %s8
  // Predicated region
  $region2: #{_decoder_forward_jit.18} parent=0 // pred_check
    _
  $region3: #{_decoder_forward_jit.18} parent=0 // pred_check_branch
    %13 = sbr.rel (0) target = $region5
  $region4: #{_decoder_forward_jit.18} parent=0 // pred_region
    _
  $region5: #{_decoder_forward_jit.18} parent=0 // pred_fallthru
    _
  // Predicated region
  $region6: #{_decoder_forward_jit.18} parent=0 // pred_check
    _
  $region7: #{_decoder_forward_jit.18} parent=0 // pred_check_branch
    %15 = sbr.rel (0) target = $region9
  $region8: #{_decoder_forward_jit.18} parent=0 // pred_region
    _
  $region9: #{_decoder_forward_jit.18} parent=0 // pred_fallthru
    _
  // Predicated region
  $region10: #{_decoder_forward_jit.18} parent=0 // pred_check
    _
  $region11: #{_decoder_forward_jit.18} parent=0 // pred_check_branch
    %17 = sbr.rel (0) target = $region13
  $region12: #{_decoder_forward_jit.18} parent=0 // pred_region
    _
  $region13: #{_decoder_forward_jit.18} parent=0 // pred_fallthru
    _
  // Predicated region
  $region14: #{_decoder_forward_jit.18} parent=0 // pred_check
    _
  $region15: #{_decoder_forward_jit.18} parent=0 // pred_check_branch
    %19 = sbr.rel (0) target = $region17
  $region16: #{_decoder_forward_jit.18} parent=0 // pred_region
    _
  $region17: #{_decoder_forward_jit.18} parent=0 // pred_fallthru
    _
  // Predicated region
  $region18: #{_decoder_forward_jit.18} parent=0 // pred_check
    _
  $region19: #{_decoder_forward_jit.18} parent=0 // pred_check_branch
    %21 = sbr.rel (0) target = $region21
  $region20: #{_decoder_forward_jit.18} parent=0 // pred_region
    _
  $region21: #{_decoder_forward_jit.18} parent=0 // pred_fallthru
    _
  // Predicated region
  $region22: #{_decoder_forward_jit.18} parent=0 // pred_check
    _
  $region23: #{_decoder_forward_jit.18} parent=0 // pred_check_branch
    %23 = sbr.rel (0) target = $region25
  $region24: #{_decoder_forward_jit.18} parent=0 // pred_region
    _
  $region25: #{_decoder_forward_jit.18} parent=0 // pred_fallthru
    _
  // Predicated region
  $region26: #{_decoder_forward_jit.18} parent=0 // pred_check
    _
  $region27: #{_decoder_forward_jit.18} parent=0 // pred_check_branch
    %25 = sbr.rel (0) target = $region29
  $region28: #{_decoder_forward_jit.18} parent=0 // pred_region
    _
  $region29: #{_decoder_forward_jit.18} parent=0 // pred_fallthru
    _
  %p26 = scmp.eq.s32.totalorder 0, 0
  // Predicated region
  $region30: #{_decoder_forward_jit.18} parent=0 // pred_check
    %p27 = pneg %p26
  $region31: #{_decoder_forward_jit.18} parent=0 // pred_check_branch
    %29 = sbr.rel (%p27) target = $region33
  $region32: #{_decoder_forward_jit.18} parent=0 // pred_region
    %v30 = vld [vmem:[%s0] sm:$0xff]
    %v31 = vld [vmem:[%s0 + $0x8] sm:$0xff]
    %v32 = vld [vmem:[%s1] sm:$0x1]
    %v33 = vld [vmem:[%s2] sm:$0x1]
    %vm34 = vcmask 261120
    %v35 = vsel %vm34, %v30, 0.0
    %36 = vadd.xlane.f32.xlu0 %v35
    %v37 = vpop.xlane.xlu0 %36
    %v38 = vsel %vm34, %v31, 0.0
    %39 = vadd.xlane.f32.xlu0 %v38
    %v40 = vpop.xlane.xlu0 %39
    %v41 = vrcp.pop 32.0
    %v42 = vmul.f32 32.0, %v41
    %v43 = vsub.f32 1.0, %v42
    %v44 = vmul.f32 %v41, %v43
    %v45 = vadd.f32 %v41, %v44
    %vm46 = vweird.f32 %v41
    %v47 = vsel %vm46, %v41, %v45
    %v48 = vmul.f32 %v37, %v47
    %v49 = vmul.f32 %v40, %v47
    %v50 = vsub.f32 %v30, %v48
    %v51 = vsub.f32 %v31, %v49
    %v52 = vmul.f32 %v50, %v50
    %v53 = vmul.f32 %v51, %v51
    %v54 = vsel %vm34, %v52, 0.0
    %55 = vadd.xlane.f32.xlu0 %v54
    %v56 = vpop.xlane.xlu0 %55
    %v57 = vsel %vm34, %v53, 0.0
    %58 = vadd.xlane.f32.xlu0 %v57
    %v59 = vpop.xlane.xlu0 %58
    %v60 = vmul.f32 %v56, 0.032258064
    %v61 = vmul.f32 %v59, 0.032258064
    %v62 = vrsqrt.pop %v60
    %v63 = vmul.f32 %v62, %v60
    %v64 = vmul.f32 %v63, %v62
    %v65 = vmul.f32 0.5, %v64
    %v66 = vsub.f32 1.5, %v65
    %v67 = vmul.f32 %v62, %v66
    %v68 = vmul.f32 %v60, %v67
    %vm69 = vcmp.eq.f32.partialorder %v60, inf
    %v70 = vsel %vm69, %v60, %v68
    %vm71 = vcmp.eq.f32.partialorder %v60, 0.0
    %v72 = vand.u32 %v60, 2147483648
    %v73 = vsel %vm71, %v72, %v70
    %v74 = vrsqrt.pop %v61
    %v75 = vmul.f32 %v74, %v61
    %v76 = vmul.f32 %v75, %v74
    %v77 = vmul.f32 0.5, %v76
    %v78 = vsub.f32 1.5, %v77
    %v79 = vmul.f32 %v74, %v78
    %v80 = vmul.f32 %v61, %v79
    %vm81 = vcmp.eq.f32.partialorder %v61, inf
    %v82 = vsel %vm81, %v61, %v80
    %vm83 = vcmp.eq.f32.partialorder %v61, 0.0
    %v84 = vand.u32 %v61, 2147483648
    %v85 = vsel %vm83, %v84, %v82
    %v86 = vadd.f32 %v73, 1e-06
    %v87 = vadd.f32 %v85, 1e-06
    %v88 = vrcp.pop %v86
    %v89 = vrcp.pop %v87
    %v91 = vperm.slane %v32, 0
    %v93 = vmul.f32 %v91, %v50
    %v94 = vmul.f32 %v91, %v51
    %v95 = vmul.f32 %v93, %v88
    %v96 = vmul.f32 %v94, %v89
    %v98 = vperm.slane %v33, 0
    %v100 = vadd.f32 %v95, %v98
    %v101 = vadd.f32 %v96, %v98
    %102 = vst.msk [vmem:[#allocation2] sm:$0xff] %vm34, %v100
    %103 = vst.msk [vmem:[#allocation2 + $0x8] sm:$0xff] %vm34, %v101
    %v104 = vld [vmem:[%s6] sm:$0x1]
    %v106 = vperm.slane %v104, 0
    %v108 = vadd.f32 %v30, %v106
    %v109 = vadd.f32 %v31, %v106
    %110 = vst.msk [vmem:[#allocation3] sm:$0xff] %vm34, %v108
    %111 = vst.msk [vmem:[#allocation3 + $0x8] sm:$0xff] %vm34, %v109
  $region33: #{_decoder_forward_jit.18} parent=0 // pred_fallthru
    _
  %v112 = vld [vmem:[#allocation2] sm:$0xff]
  %v113 = vld [vmem:[#allocation2 + $0x8] sm:$0xff]
  %v114 = vld [vmem:[%s3] sm:$0xff]
  %v115 = vld [vmem:[%s3 + $0x8] sm:$0xff]
  %v116 = vld [vmem:[%s3 + $0x10] sm:$0xff]
  %v117 = vld [vmem:[%s3 + $0x18] sm:$0xff]
  %v118 = vld [vmem:[%s4] sm:$0x1]
  %v120 = vperm.slane %v118, 0
  %vm122 = vcmask 261120
  %v124 = vsel %vm122, %v112, 0
  %v127 = vsel %vm122, %v113, 0
  %129 = vmatpush.msra.mxu0 0.0
  %130 = vmatpush.msra.mxu0 0.0
  %131 = vmatpush.msra.mxu0 0.0
  %132 = vmatpush.msra.mxu0 0.0
  %133 = vmatpush.msra.mxu0 0.0
  %134 = vmatpush.msra.mxu0 0.0
  %135 = vmatpush.msra.mxu0 0.0
  %136 = vmatpush.msra.mxu0 0.0
  %137 = vmatpush.msra.mxu0 0.0
  %138 = vmatpush.msra.mxu0 0.0
  %139 = vmatpush.msra.mxu0 0.0
  %140 = vmatpush.msra.mxu0 0.0
  %141 = vmatpush.msra.mxu0 %v117
  %142 = vmatpush.msra.mxu0 %v116
  %143 = vmatpush.msra.mxu0 %v115
  %144 = vmatpush.msra.mxu0 %v114
  %145 = vmatmul.f32.gmra.mxu0 %v124
  %v146 = vpop.f32.mrf.mxu0
  %v147 = vadd.f32 %v120, %v146
  %148 = vmatmul.f32.gmra.mxu0 %v127
  %v149 = vpop.f32.mrf.mxu0
  %v150 = vadd.f32 %v120, %v149
  %151 = vdwg.mxu0
  %v152 = vmax.f32 %v147, 0.0
  %v153 = vmax.f32 %v150, 0.0
  %v154 = vld [vmem:[#allocation3] sm:$0xff]
  %v155 = vld [vmem:[#allocation3 + $0x8] sm:$0xff]
  %v156 = vld [vmem:[%s5] sm:$0xff]
  %v157 = vld [vmem:[%s5 + $0x8] sm:$0xff]
  %v158 = vld [vmem:[%s5 + $0x10] sm:$0xff]
  %v159 = vld [vmem:[%s5 + $0x18] sm:$0xff]
  %v160 = vld [vmem:[%s5 + $0x20] sm:$0xff]
  %v161 = vld [vmem:[%s5 + $0x28] sm:$0xff]
  %v162 = vld [vmem:[%s5 + $0x30] sm:$0xff]
  %v163 = vld [vmem:[%s5 + $0x38] sm:$0xff]
  %vm164 = vcmask 523264
  %v166 = vsel %vm164, %v152, 0
  %v169 = vsel %vm164, %v153, 0
  %171 = vmatpush.msra.mxu0 0.0
  %172 = vmatpush.msra.mxu0 0.0
  %173 = vmatpush.msra.mxu0 0.0
  %174 = vmatpush.msra.mxu0 0.0
  %175 = vmatpush.msra.mxu0 0.0
  %176 = vmatpush.msra.mxu0 0.0
  %177 = vmatpush.msra.mxu0 0.0
  %178 = vmatpush.msra.mxu0 0.0
  %179 = vmatpush.msra.mxu0 %v163
  %180 = vmatpush.msra.mxu0 %v162
  %181 = vmatpush.msra.mxu0 %v161
  %182 = vmatpush.msra.mxu0 %v160
  %183 = vmatpush.msra.mxu0 %v159
  %184 = vmatpush.msra.mxu0 %v158
  %185 = vmatpush.msra.mxu0 %v157
  %186 = vmatpush.msra.mxu0 %v156
  %187 = vmatmul.f32.gmra.mxu0 %v166
  %v188 = vpop.f32.mrf.mxu0
  %v189 = vadd.f32 0.0, %v188
  %190 = vmatmul.f32.gmra.mxu0 %v169
  %v191 = vpop.f32.mrf.mxu0
  %v192 = vadd.f32 0.0, %v191
  %193 = vdwg.mxu0
  %v194 = vadd.f32 %v154, %v189
  %v195 = vadd.f32 %v155, %v192
  %196 = vst.msk [vmem:[#allocation3] sm:$0xff] %vm122, %v194
  %197 = vst.msk [vmem:[#allocation3 + $0x8] sm:$0xff] %vm122, %v195
  // Predicated region
  $region34: #{_decoder_forward_jit.18} parent=0 // pred_check
    %p198 = pneg %p26
  $region35: #{_decoder_forward_jit.18} parent=0 // pred_check_branch
    %200 = sbr.rel (%p198) target = $region37
  $region36: #{_decoder_forward_jit.18} parent=0 // pred_region
    %v201 = vld [vmem:[#allocation3] sm:$0xff]
    %v202 = vld [vmem:[#allocation3 + $0x8] sm:$0xff]
    %203 = vst.msk [vmem:[%s7] sm:$0xff] %vm122, %v201
    %204 = vst.msk [vmem:[%s7 + $0x8] sm:$0xff] %vm122, %v202
  $region37: #{_decoder_forward_jit.18} parent=0 // pred_fallthru
    _
  // Predicated region
  $region38: #{_decoder_forward_jit.18} parent=0 // pred_check
    _
  $region39: #{_decoder_forward_jit.18} parent=0 // pred_check_branch
    %206 = sbr.rel (0) target = $region41
  $region40: #{_decoder_forward_jit.18} parent=0 // pred_region
    _
  $region41: #{_decoder_forward_jit.18} parent=0 // pred_fallthru
    _
  // Predicated region
  $region42: #{_decoder_forward_jit.18} parent=0 // pred_check
    _
  $region43: #{_decoder_forward_jit.18} parent=0 // pred_check_branch
    %208 = sbr.rel (0) target = $region45
  $region44: #{_decoder_forward_jit.18} parent=0 // pred_region
    _
  $region45: #{_decoder_forward_jit.18} parent=0 // pred_fallthru
    _

// kernel: _decoder_forward_jit.25
$region0: #{_decoder_forward_jit.25}
  #allocation0 [shape = 'u32[]', space=smem, size = 0x4, offset = 0x4, fixed_abs, tag = 'smem constant byte address 0x4 - core index']
  #allocation1 [shape = 'u32[72,128]{1,0:T(1,128)}', space=vmem, size = 0x9000, scoped, tag = 'internal scratch']
  %s0 = inlined_call_operand.vmem [shape: f32[16,32], index: 0, kind: input, shape index: {}]
  %s1 = inlined_call_operand.vmem [shape: f32[1,32], index: 1, kind: input, shape index: {}]
  %s2 = inlined_call_operand.vmem [shape: f32[1,32], index: 2, kind: input, shape index: {}]
  %s3 = inlined_call_operand.hbm [shape: f32[16,32], index: 3, kind: output, shape index: {}]
  %s4 = sld [smem:[#allocation0]]
  $region22: #{_decoder_forward_jit.25} parent=0
    _
  %s6 = ssub.s32 1, %s4
  %s7 = scalar_select 0, %s6, %s4
  $region1: #{_decoder_forward_jit.25} parent=0
    #allocation2 [shape = 'u8[8192]{0}', space=vmem, size = 0x2000, scoped, tag = 'output window, operand 0, single buffered']
    #allocation3 [shape = 's32[1]{0}', space=sflag, size = 0x4, scoped, tag = 'scoped memory for _decoder_forward_jit.25']
    %8 = vsyncpa [#allocation3], 0
    // Predicated region
    $region2: #{_decoder_forward_jit.25} parent=1 // pred_check
      _
    $region3: #{_decoder_forward_jit.25} parent=1 // pred_check_branch
      %10 = sbr.rel (0) target = $region5
    $region4: #{_decoder_forward_jit.25} parent=1 // pred_region
      _
    $region5: #{_decoder_forward_jit.25} parent=1 // pred_fallthru
      _
    // Predicated region
    $region6: #{_decoder_forward_jit.25} parent=1 // pred_check
      _
    $region7: #{_decoder_forward_jit.25} parent=1 // pred_check_branch
      %12 = sbr.rel (0) target = $region9
    $region8: #{_decoder_forward_jit.25} parent=1 // pred_region
      _
    $region9: #{_decoder_forward_jit.25} parent=1 // pred_fallthru
      _
    // Predicated region
    $region10: #{_decoder_forward_jit.25} parent=1 // pred_check
      _
    $region11: #{_decoder_forward_jit.25} parent=1 // pred_check_branch
      %14 = sbr.rel (0) target = $region13
    $region12: #{_decoder_forward_jit.25} parent=1 // pred_region
      _
    $region13: #{_decoder_forward_jit.25} parent=1 // pred_fallthru
      _
    %v15 = vld [vmem:[%s0] sm:$0xff]
    %v16 = vld [vmem:[%s0 + $0x8] sm:$0xff]
    %v17 = vld [vmem:[%s1] sm:$0x1]
    %v18 = vld [vmem:[%s2] sm:$0x1]
    %vm19 = vcmask 261120
    %v20 = vsel %vm19, %v15, 0.0
    %21 = vadd.xlane.f32.xlu0 %v20
    %v22 = vpop.xlane.xlu0 %21
    %v23 = vsel %vm19, %v16, 0.0
    %24 = vadd.xlane.f32.xlu0 %v23
    %v25 = vpop.xlane.xlu0 %24
    %v26 = vrcp.pop 32.0
    %v27 = vmul.f32 32.0, %v26
    %v28 = vsub.f32 1.0, %v27
    %v29 = vmul.f32 %v26, %v28
    %v30 = vadd.f32 %v26, %v29
    %vm31 = vweird.f32 %v26
    %v32 = vsel %vm31, %v26, %v30
    %v33 = vmul.f32 %v22, %v32
    %v34 = vmul.f32 %v25, %v32
    %v35 = vsub.f32 %v15, %v33
    %v36 = vsub.f32 %v16, %v34
    %v37 = vmul.f32 %v35, %v35
    %v38 = vmul.f32 %v36, %v36
    %v39 = vsel %vm19, %v37, 0.0
    %40 = vadd.xlane.f32.xlu0 %v39
    %v41 = vpop.xlane.xlu0 %40
    %v42 = vsel %vm19, %v38, 0.0
    %43 = vadd.xlane.f32.xlu0 %v42
    %v44 = vpop.xlane.xlu0 %43
    %v45 = vmul.f32 %v41, 0.032258064
    %v46 = vmul.f32 %v44, 0.032258064
    %v47 = vrsqrt.pop %v45
    %v48 = vmul.f32 %v47, %v45
    %v49 = vmul.f32 %v48, %v47
    %v50 = vmul.f32 0.5, %v49
    %v51 = vsub.f32 1.5, %v50
    %v52 = vmul.f32 %v47, %v51
    %v53 = vmul.f32 %v45, %v52
    %vm54 = vcmp.eq.f32.partialorder %v45, inf
    %v55 = vsel %vm54, %v45, %v53
    %vm56 = vcmp.eq.f32.partialorder %v45, 0.0
    %v57 = vand.u32 %v45, 2147483648
    %v58 = vsel %vm56, %v57, %v55
    %v59 = vrsqrt.pop %v46
    %v60 = vmul.f32 %v59, %v46
    %v61 = vmul.f32 %v60, %v59
    %v62 = vmul.f32 0.5, %v61
    %v63 = vsub.f32 1.5, %v62
    %v64 = vmul.f32 %v59, %v63
    %v65 = vmul.f32 %v46, %v64
    %vm66 = vcmp.eq.f32.partialorder %v46, inf
    %v67 = vsel %vm66, %v46, %v65
    %vm68 = vcmp.eq.f32.partialorder %v46, 0.0
    %v69 = vand.u32 %v46, 2147483648
    %v70 = vsel %vm68, %v69, %v67
    %v71 = vadd.f32 %v58, 1e-06
    %v72 = vadd.f32 %v70, 1e-06
    %v73 = vrcp.pop %v71
    %v74 = vrcp.pop %v72
    %v76 = vperm.slane %v17, 0
    %v78 = vmul.f32 %v76, %v35
    %v79 = vmul.f32 %v76, %v36
    %v80 = vmul.f32 %v78, %v73
    %v81 = vmul.f32 %v79, %v74
    %v83 = vperm.slane %v18, 0
    %v85 = vadd.f32 %v80, %v83
    %v86 = vadd.f32 %v81, %v83
    %87 = vst.msk [vmem:[#allocation2] sm:$0xff] %vm19, %v85
    %88 = vst.msk [vmem:[#allocation2 + $0x8] sm:$0xff] %vm19, %v86
    // Predicated region
    $region14: #{_decoder_forward_jit.25} parent=1 // pred_check
      _
    $region15: #{_decoder_forward_jit.25} parent=1 // pred_check_branch
      %90 = sbr.rel (0) target = $region17
    $region16: #{_decoder_forward_jit.25} parent=1 // pred_region
      %92 = vsyncadd [#allocation3], 0
      %s93 = sshll.u32 [#allocation2], 4
      %s94 = int_to_ptr.vmem [resolvable:$true] %s93
      %s95 = sshll.u32 %s3, 4
      %s96 = int_to_ptr.hbm [resolvable:$true] %s95
      %101 = dma.vmem_to_hbm [thread:$0]  %s94, 256, %s96, [#allocation3], 128, 128, 8
    $region17: #{_decoder_forward_jit.25} parent=1 // pred_fallthru
      _
    // Predicated region
    $region18: #{_decoder_forward_jit.25} parent=1 // pred_check
      _
    $region19: #{_decoder_forward_jit.25} parent=1 // pred_check_branch
      %103 = sbr.rel (0) target = $region21
    $region20: #{_decoder_forward_jit.25} parent=1 // pred_region
      %105 = dma.done [#allocation3], 256
    $region21: #{_decoder_forward_jit.25} parent=1 // pred_fallthru
      _
    %106 = vsyncpa [#allocation3], 1

</llo_original>
